<compile_context>
chip_gen: v5e
topology: v5e:2x2
jax: 0.10.0
libtpu: 0.0.40
codegen_flags: <defaults>
</compile_context>

<pallas_src>
import math

import jax
import jax.numpy as jnp
from jax.experimental import pallas as pl
from jax.experimental.pallas import tpu as pltpu

BN_EPS = 1e-5
IN_FEATURES = 1000
IN_PADDED = 1024  # 1000 -> 1024: explicit lane / K-axis alignment

# (in, out) per Linear layer, with fc1's fan-in padded to 1024.
LAYER_DIMS = [(IN_PADDED, 512), (512, 256), (256, 128), (128, 64), (64, 1)]


def _round_up(n, m):
    return (n + m - 1) // m * m


# ---- packed vector parameters (biases, BN gamma/beta, fc5 weight row) -------
# Every segment starts at a 128-lane-aligned offset so the in-kernel static
# slices are lane-aligned and free.
_VEC_SEGMENTS = [
    ("b1", 512), ("g1", 512), ("be1", 512),
    ("b2", 256), ("g2", 256), ("be2", 256),
    ("b3", 128), ("g3", 128), ("be3", 128),
    ("b4", 64),  ("g4", 64),  ("be4", 64),
    ("b5", 1),   ("w5", 64),
]
VEC_OFFSETS = {}
_off = 0
for _name, _size in _VEC_SEGMENTS:
    VEC_OFFSETS[_name] = (_off, _size)
    _off += _round_up(_size, 128)
VEC_TOTAL = _off  # 3328 = 26 * 128


# ------------------------------- kernel --------------------------------------
def _vec(vec_ref, name):
    off, size = VEC_OFFSETS[name]
    return vec_ref[:, off:off + size]          # static, lane-aligned slice


def _linear_relu_bn(x, w_ref, b, g, beta):
    """y = BatchNorm1d(ReLU(x @ W + b)) with batch statistics (training mode)."""
    # bf16 operands on the MXU, f32 accumulation.
    h = jnp.dot(x.astype(jnp.bfloat16), w_ref[...],
                preferred_element_type=jnp.float32) + b
    h = jnp.maximum(h, 0.0)                                   # ReLU
    # Single-pass biased variance: E[h^2] - E[h]^2 (two sublane reductions).
    mean = jnp.mean(h, axis=0, keepdims=True)                 # (1, F)
    mean_sq = jnp.mean(h * h, axis=0, keepdims=True)          # (1, F)
    var = mean_sq - mean * mean
    h_hat = (h - mean) * jax.lax.rsqrt(var + BN_EPS)
    return h_hat * g + beta


def mlp_kernel(x_ref, w1, w2, w3, w4, vec_ref, out_ref):
    x = x_ref[...]                                            # (B, 1024) bf16
    h = _linear_relu_bn(x, w1, _vec(vec_ref, "b1"),
                        _vec(vec_ref, "g1"), _vec(vec_ref, "be1"))
    h = _linear_relu_bn(h, w2, _vec(vec_ref, "b2"),
                        _vec(vec_ref, "g2"), _vec(vec_ref, "be2"))
    h = _linear_relu_bn(h, w3, _vec(vec_ref, "b3"),
                        _vec(vec_ref, "g3"), _vec(vec_ref, "be3"))
    h = _linear_relu_bn(h, w4, _vec(vec_ref, "b4"),
                        _vec(vec_ref, "g4"), _vec(vec_ref, "be4"))
    # fc5: (B,64) @ (64,1) done as a lane reduction (no degenerate N=1 matmul).
    w5_row = _vec(vec_ref, "w5")                              # (1, 64) f32
    logits = jnp.sum(h * w5_row, axis=-1, keepdims=True) + _vec(vec_ref, "b5")
    out_ref[...] = jax.nn.sigmoid(logits)                     # EUP exp


# ------------------------------ wrapper ---------------------------------------
def sentiment_classifier(x, weights_bf16, vec_f32):
    """x: (B, 1000) float32 -> (B, 1) float32 in [0, 1]."""
    B = x.shape[0]
    # Pad the feature axis to 1024 (w1 padded to match) and cast to bf16 so the
    # activation operand of the first matmul is MXU-native too.
    x_p = jnp.pad(x, ((0, 0), (0, IN_PADDED - x.shape[1]))).astype(jnp.bfloat16)

    flops = 2 * B * sum(i * o for i, o in LAYER_DIMS)
    transcendentals = B + sum(o for _, o in LAYER_DIMS[:-1])  # sigmoid + rsqrt
    bytes_accessed = (x_p.size * 2
                      + sum(int(w.size) * 2 for w in weights_bf16)
                      + vec_f32.size * 4
                      + B * 4)

    args = [x_p] + list(weights_bf16) + [vec_f32]
    return pl.pallas_call(
        mlp_kernel,
        out_shape=jax.ShapeDtypeStruct((B, 1), jnp.float32),
        in_specs=[pl.BlockSpec(memory_space=pltpu.MemorySpace.VMEM)] * len(args),
        out_specs=pl.BlockSpec(memory_space=pltpu.MemorySpace.VMEM),
        compiler_params=pltpu.CompilerParams(vmem_limit_bytes=32 * 1024 * 1024),
        cost_estimate=pl.CostEstimate(flops=flops,
                                      transcendentals=transcendentals,
                                      bytes_accessed=bytes_accessed),
    )(*args)


# ------------------------------ parameters ------------------------------------
def init_params(key):
    """Deterministic synthetic params with the torch module's shapes (f32).

    Linear weights are stored as (in, out) — transpose of torch's (out, in).
    """
    dims = [(IN_FEATURES, 512), (512, 256), (256, 128), (128, 64), (64, 1)]
    p = {}
    for li, (fan_in, fan_out) in enumerate(dims, start=1):
        k_w, k_b, k_g, k_be, key = jax.random.split(key, 5)
        bound = 1.0 / math.sqrt(fan_in)
        p[f"w{li}"] = jax.random.uniform(k_w, (fan_in, fan_out), jnp.float32,
                                         -bound, bound)
        p[f"b{li}"] = jax.random.uniform(k_b, (1, fan_out), jnp.float32,
                                         -bound, bound)
        if li < 5:  # bn1..bn4 affine params
            p[f"g{li}"] = 1.0 + 0.1 * jax.random.normal(k_g, (1, fan_out),
                                                        jnp.float32)
            p[f"be{li}"] = 0.1 * jax.random.normal(k_be, (1, fan_out),
                                                   jnp.float32)
    return p


def pack_params(p):
    """f32 param dict -> ([w1..w4] bf16, packed f32 vector-param array)."""
    w1 = jnp.pad(p["w1"], ((0, IN_PADDED - IN_FEATURES), (0, 0)))  # zero-pad K
    weights = [w1.astype(jnp.bfloat16),
               p["w2"].astype(jnp.bfloat16),
               p["w3"].astype(jnp.bfloat16),
               p["w4"].astype(jnp.bfloat16)]
    vec = jnp.zeros((1, VEC_TOTAL), jnp.float32)
    for name, _ in _VEC_SEGMENTS:
        off, size = VEC_OFFSETS[name]
        val = p["w5"].reshape(1, 64) if name == "w5" else p[name]
        vec = vec.at[:, off:off + size].set(val)
    return weights, vec


# ------------------------------ reference -------------------------------------
def reference_forward(x, p):
    """Pure-JAX reference using the same bf16 weights as the kernel."""
    h = x
    for li in range(1, 5):
        w = p[f"w{li}"].astype(jnp.bfloat16)
        h = jnp.dot(h.astype(jnp.bfloat16), w,
                    preferred_element_type=jnp.float32) + p[f"b{li}"]
        h = jnp.maximum(h, 0.0)
        mean = jnp.mean(h, axis=0, keepdims=True)
        var = jnp.mean((h - mean) ** 2, axis=0, keepdims=True)
        h = (h - mean) * jax.lax.rsqrt(var + BN_EPS) * p[f"g{li}"] + p[f"be{li}"]
    logits = jnp.dot(h, p["w5"]) + p["b5"]
    return jax.nn.sigmoid(logits)


if __name__ == "__main__":
    key = jax.random.PRNGKey(0)
    k_x, k_p = jax.random.split(key)
    B = 8  # BatchNorm batch statistics need B > 1
    x = jax.random.normal(k_x, (B, IN_FEATURES), jnp.float32)

    params = init_params(k_p)
    weights_bf16, vec = pack_params(params)

    run = jax.jit(sentiment_classifier)
    out = jax.block_until_ready(run(x, weights_bf16, vec))

    assert out.shape == (B, 1) and out.dtype == jnp.float32
    assert bool(jnp.all((out >= 0.0) & (out <= 1.0)))

    ref = reference_forward(x, params)
    assert bool(jnp.allclose(out, ref, atol=5e-3, rtol=5e-3)), float(
        jnp.max(jnp.abs(out - ref)))
    print("KERNEL_OK")
</pallas_src>

<mosaic_0001>
module attributes {stable_mosaic.version = 11 : i64} {
  func.func @mlp_kernel(%arg0: memref<8x1024xbf16, #tpu.memory_space<vmem>>, %arg1: memref<1024x512xbf16, #tpu.memory_space<vmem>>, %arg2: memref<512x256xbf16, #tpu.memory_space<vmem>>, %arg3: memref<256x128xbf16, #tpu.memory_space<vmem>>, %arg4: memref<128x64xbf16, #tpu.memory_space<vmem>>, %arg5: memref<1x3328xf32, #tpu.memory_space<vmem>>, %arg6: memref<8x1xf32, #tpu.memory_space<vmem>>) attributes {dimension_semantics = [], scalar_prefetch = 0 : i64, scratch_operands = 0 : i64, tpu.core_type = #tpu.core_type<tc>} {
    %c0 = arith.constant 0 : index
    %c0_0 = arith.constant 0 : index
    %0 = vector.load %arg0[%c0, %c0_0] : memref<8x1024xbf16, #tpu.memory_space<vmem>>, vector<8x1024xbf16>
    %c0_1 = arith.constant 0 : index
    %c0_2 = arith.constant 0 : index
    %1 = vector.load %arg5[%c0_1, %c0_2] : memref<1x3328xf32, #tpu.memory_space<vmem>>, vector<1x512xf32>
    %c0_3 = arith.constant 0 : index
    %c512 = arith.constant 512 : index
    %2 = vector.load %arg5[%c0_3, %c512] : memref<1x3328xf32, #tpu.memory_space<vmem>>, vector<1x512xf32>
    %c0_4 = arith.constant 0 : index
    %c1024 = arith.constant 1024 : index
    %3 = vector.load %arg5[%c0_4, %c1024] : memref<1x3328xf32, #tpu.memory_space<vmem>>, vector<1x512xf32>
    %c0_5 = arith.constant 0 : index
    %c0_6 = arith.constant 0 : index
    %4 = vector.load %arg1[%c0_5, %c0_6] : memref<1024x512xbf16, #tpu.memory_space<vmem>>, vector<1024x512xbf16>
    %cst = arith.constant dense<0.000000e+00> : vector<8x512xf32>
    %5 = tpu.matmul %0, %4, %cst {dimension_numbers = #tpu.dot_dimension_numbers<[1], [0], [0], [1], [0, 0, 1, 1], [], []>} : vector<8x1024xbf16>, vector<1024x512xbf16>, vector<8x512xf32> -> vector<8x512xf32>
    %6 = vector.broadcast %1 : vector<1x512xf32> to vector<8x512xf32>
    %7 = arith.addf %5, %6 : vector<8x512xf32>
    %cst_7 = arith.constant 0.000000e+00 : f32
    %8 = vector.broadcast %cst_7 : f32 to vector<8x512xf32>
    %9 = arith.maximumf %7, %8 : vector<8x512xf32>
    %cst_8 = arith.constant dense<0.000000e+00> : vector<512xf32>
    %10 = vector.multi_reduction <add>, %9, %cst_8 [0] : vector<8x512xf32> to vector<512xf32>
    %11 = vector.shape_cast %10 : vector<512xf32> to vector<1x512xf32>
    %cst_9 = arith.constant 8.000000e+00 : f32
    %12 = vector.broadcast %cst_9 : f32 to vector<1x512xf32>
    %13 = arith.divf %11, %12 : vector<1x512xf32>
    %14 = arith.mulf %9, %9 : vector<8x512xf32>
    %cst_10 = arith.constant dense<0.000000e+00> : vector<512xf32>
    %15 = vector.multi_reduction <add>, %14, %cst_10 [0] : vector<8x512xf32> to vector<512xf32>
    %16 = vector.shape_cast %15 : vector<512xf32> to vector<1x512xf32>
    %cst_11 = arith.constant 8.000000e+00 : f32
    %17 = vector.broadcast %cst_11 : f32 to vector<1x512xf32>
    %18 = arith.divf %16, %17 : vector<1x512xf32>
    %19 = arith.mulf %13, %13 : vector<1x512xf32>
    %20 = arith.subf %18, %19 : vector<1x512xf32>
    %21 = vector.broadcast %13 : vector<1x512xf32> to vector<8x512xf32>
    %22 = arith.subf %9, %21 : vector<8x512xf32>
    %cst_12 = arith.constant 9.99999974E-6 : f32
    %23 = vector.broadcast %cst_12 : f32 to vector<1x512xf32>
    %24 = arith.addf %20, %23 : vector<1x512xf32>
    %25 = math.rsqrt %24 : vector<1x512xf32>
    %26 = vector.broadcast %25 : vector<1x512xf32> to vector<8x512xf32>
    %27 = arith.mulf %22, %26 : vector<8x512xf32>
    %28 = vector.broadcast %2 : vector<1x512xf32> to vector<8x512xf32>
    %29 = arith.mulf %27, %28 : vector<8x512xf32>
    %30 = vector.broadcast %3 : vector<1x512xf32> to vector<8x512xf32>
    %31 = arith.addf %29, %30 : vector<8x512xf32>
    %c0_13 = arith.constant 0 : index
    %c1536 = arith.constant 1536 : index
    %32 = vector.load %arg5[%c0_13, %c1536] : memref<1x3328xf32, #tpu.memory_space<vmem>>, vector<1x256xf32>
    %c0_14 = arith.constant 0 : index
    %c1792 = arith.constant 1792 : index
    %33 = vector.load %arg5[%c0_14, %c1792] : memref<1x3328xf32, #tpu.memory_space<vmem>>, vector<1x256xf32>
    %c0_15 = arith.constant 0 : index
    %c2048 = arith.constant 2048 : index
    %34 = vector.load %arg5[%c0_15, %c2048] : memref<1x3328xf32, #tpu.memory_space<vmem>>, vector<1x256xf32>
    %35 = arith.truncf %31 : vector<8x512xf32> to vector<8x512xbf16>
    %c0_16 = arith.constant 0 : index
    %c0_17 = arith.constant 0 : index
    %36 = vector.load %arg2[%c0_16, %c0_17] : memref<512x256xbf16, #tpu.memory_space<vmem>>, vector<512x256xbf16>
    %cst_18 = arith.constant dense<0.000000e+00> : vector<8x256xf32>
    %37 = tpu.matmul %35, %36, %cst_18 {dimension_numbers = #tpu.dot_dimension_numbers<[1], [0], [0], [1], [0, 0, 1, 1], [], []>} : vector<8x512xbf16>, vector<512x256xbf16>, vector<8x256xf32> -> vector<8x256xf32>
    %38 = vector.broadcast %32 : vector<1x256xf32> to vector<8x256xf32>
    %39 = arith.addf %37, %38 : vector<8x256xf32>
    %cst_19 = arith.constant 0.000000e+00 : f32
    %40 = vector.broadcast %cst_19 : f32 to vector<8x256xf32>
    %41 = arith.maximumf %39, %40 : vector<8x256xf32>
    %cst_20 = arith.constant dense<0.000000e+00> : vector<256xf32>
    %42 = vector.multi_reduction <add>, %41, %cst_20 [0] : vector<8x256xf32> to vector<256xf32>
    %43 = vector.shape_cast %42 : vector<256xf32> to vector<1x256xf32>
    %cst_21 = arith.constant 8.000000e+00 : f32
    %44 = vector.broadcast %cst_21 : f32 to vector<1x256xf32>
    %45 = arith.divf %43, %44 : vector<1x256xf32>
    %46 = arith.mulf %41, %41 : vector<8x256xf32>
    %cst_22 = arith.constant dense<0.000000e+00> : vector<256xf32>
    %47 = vector.multi_reduction <add>, %46, %cst_22 [0] : vector<8x256xf32> to vector<256xf32>
    %48 = vector.shape_cast %47 : vector<256xf32> to vector<1x256xf32>
    %cst_23 = arith.constant 8.000000e+00 : f32
    %49 = vector.broadcast %cst_23 : f32 to vector<1x256xf32>
    %50 = arith.divf %48, %49 : vector<1x256xf32>
    %51 = arith.mulf %45, %45 : vector<1x256xf32>
    %52 = arith.subf %50, %51 : vector<1x256xf32>
    %53 = vector.broadcast %45 : vector<1x256xf32> to vector<8x256xf32>
    %54 = arith.subf %41, %53 : vector<8x256xf32>
    %cst_24 = arith.constant 9.99999974E-6 : f32
    %55 = vector.broadcast %cst_24 : f32 to vector<1x256xf32>
    %56 = arith.addf %52, %55 : vector<1x256xf32>
    %57 = math.rsqrt %56 : vector<1x256xf32>
    %58 = vector.broadcast %57 : vector<1x256xf32> to vector<8x256xf32>
    %59 = arith.mulf %54, %58 : vector<8x256xf32>
    %60 = vector.broadcast %33 : vector<1x256xf32> to vector<8x256xf32>
    %61 = arith.mulf %59, %60 : vector<8x256xf32>
    %62 = vector.broadcast %34 : vector<1x256xf32> to vector<8x256xf32>
    %63 = arith.addf %61, %62 : vector<8x256xf32>
    %c0_25 = arith.constant 0 : index
    %c2304 = arith.constant 2304 : index
    %64 = vector.load %arg5[%c0_25, %c2304] : memref<1x3328xf32, #tpu.memory_space<vmem>>, vector<1x128xf32>
    %c0_26 = arith.constant 0 : index
    %c2432 = arith.constant 2432 : index
    %65 = vector.load %arg5[%c0_26, %c2432] : memref<1x3328xf32, #tpu.memory_space<vmem>>, vector<1x128xf32>
    %c0_27 = arith.constant 0 : index
    %c2560 = arith.constant 2560 : index
    %66 = vector.load %arg5[%c0_27, %c2560] : memref<1x3328xf32, #tpu.memory_space<vmem>>, vector<1x128xf32>
    %67 = arith.truncf %63 : vector<8x256xf32> to vector<8x256xbf16>
    %c0_28 = arith.constant 0 : index
    %c0_29 = arith.constant 0 : index
    %68 = vector.load %arg3[%c0_28, %c0_29] : memref<256x128xbf16, #tpu.memory_space<vmem>>, vector<256x128xbf16>
    %cst_30 = arith.constant dense<0.000000e+00> : vector<8x128xf32>
    %69 = tpu.matmul %67, %68, %cst_30 {dimension_numbers = #tpu.dot_dimension_numbers<[1], [0], [0], [1], [0, 0, 1, 1], [], []>} : vector<8x256xbf16>, vector<256x128xbf16>, vector<8x128xf32> -> vector<8x128xf32>
    %70 = vector.broadcast %64 : vector<1x128xf32> to vector<8x128xf32>
    %71 = arith.addf %69, %70 : vector<8x128xf32>
    %cst_31 = arith.constant 0.000000e+00 : f32
    %72 = vector.broadcast %cst_31 : f32 to vector<8x128xf32>
    %73 = arith.maximumf %71, %72 : vector<8x128xf32>
    %cst_32 = arith.constant dense<0.000000e+00> : vector<128xf32>
    %74 = vector.multi_reduction <add>, %73, %cst_32 [0] : vector<8x128xf32> to vector<128xf32>
    %75 = vector.shape_cast %74 : vector<128xf32> to vector<1x128xf32>
    %cst_33 = arith.constant 8.000000e+00 : f32
    %76 = vector.broadcast %cst_33 : f32 to vector<1x128xf32>
    %77 = arith.divf %75, %76 : vector<1x128xf32>
    %78 = arith.mulf %73, %73 : vector<8x128xf32>
    %cst_34 = arith.constant dense<0.000000e+00> : vector<128xf32>
    %79 = vector.multi_reduction <add>, %78, %cst_34 [0] : vector<8x128xf32> to vector<128xf32>
    %80 = vector.shape_cast %79 : vector<128xf32> to vector<1x128xf32>
    %cst_35 = arith.constant 8.000000e+00 : f32
    %81 = vector.broadcast %cst_35 : f32 to vector<1x128xf32>
    %82 = arith.divf %80, %81 : vector<1x128xf32>
    %83 = arith.mulf %77, %77 : vector<1x128xf32>
    %84 = arith.subf %82, %83 : vector<1x128xf32>
    %85 = vector.broadcast %77 : vector<1x128xf32> to vector<8x128xf32>
    %86 = arith.subf %73, %85 : vector<8x128xf32>
    %cst_36 = arith.constant 9.99999974E-6 : f32
    %87 = vector.broadcast %cst_36 : f32 to vector<1x128xf32>
    %88 = arith.addf %84, %87 : vector<1x128xf32>
    %89 = math.rsqrt %88 : vector<1x128xf32>
    %90 = vector.broadcast %89 : vector<1x128xf32> to vector<8x128xf32>
    %91 = arith.mulf %86, %90 : vector<8x128xf32>
    %92 = vector.broadcast %65 : vector<1x128xf32> to vector<8x128xf32>
    %93 = arith.mulf %91, %92 : vector<8x128xf32>
    %94 = vector.broadcast %66 : vector<1x128xf32> to vector<8x128xf32>
    %95 = arith.addf %93, %94 : vector<8x128xf32>
    %c0_37 = arith.constant 0 : index
    %c2688 = arith.constant 2688 : index
    %96 = vector.load %arg5[%c0_37, %c2688] : memref<1x3328xf32, #tpu.memory_space<vmem>>, vector<1x64xf32>
    %c0_38 = arith.constant 0 : index
    %c2816 = arith.constant 2816 : index
    %97 = vector.load %arg5[%c0_38, %c2816] : memref<1x3328xf32, #tpu.memory_space<vmem>>, vector<1x64xf32>
    %c0_39 = arith.constant 0 : index
    %c2944 = arith.constant 2944 : index
    %98 = vector.load %arg5[%c0_39, %c2944] : memref<1x3328xf32, #tpu.memory_space<vmem>>, vector<1x64xf32>
    %99 = arith.truncf %95 : vector<8x128xf32> to vector<8x128xbf16>
    %c0_40 = arith.constant 0 : index
    %c0_41 = arith.constant 0 : index
    %100 = vector.load %arg4[%c0_40, %c0_41] : memref<128x64xbf16, #tpu.memory_space<vmem>>, vector<128x64xbf16>
    %cst_42 = arith.constant dense<0.000000e+00> : vector<8x64xf32>
    %101 = tpu.matmul %99, %100, %cst_42 {dimension_numbers = #tpu.dot_dimension_numbers<[1], [0], [0], [1], [0, 0, 1, 1], [], []>} : vector<8x128xbf16>, vector<128x64xbf16>, vector<8x64xf32> -> vector<8x64xf32>
    %102 = vector.broadcast %96 : vector<1x64xf32> to vector<8x64xf32>
    %103 = arith.addf %101, %102 : vector<8x64xf32>
    %cst_43 = arith.constant 0.000000e+00 : f32
    %104 = vector.broadcast %cst_43 : f32 to vector<8x64xf32>
    %105 = arith.maximumf %103, %104 : vector<8x64xf32>
    %cst_44 = arith.constant dense<0.000000e+00> : vector<64xf32>
    %106 = vector.multi_reduction <add>, %105, %cst_44 [0] : vector<8x64xf32> to vector<64xf32>
    %107 = vector.shape_cast %106 : vector<64xf32> to vector<1x64xf32>
    %cst_45 = arith.constant 8.000000e+00 : f32
    %108 = vector.broadcast %cst_45 : f32 to vector<1x64xf32>
    %109 = arith.divf %107, %108 : vector<1x64xf32>
    %110 = arith.mulf %105, %105 : vector<8x64xf32>
    %cst_46 = arith.constant dense<0.000000e+00> : vector<64xf32>
    %111 = vector.multi_reduction <add>, %110, %cst_46 [0] : vector<8x64xf32> to vector<64xf32>
    %112 = vector.shape_cast %111 : vector<64xf32> to vector<1x64xf32>
    %cst_47 = arith.constant 8.000000e+00 : f32
    %113 = vector.broadcast %cst_47 : f32 to vector<1x64xf32>
    %114 = arith.divf %112, %113 : vector<1x64xf32>
    %115 = arith.mulf %109, %109 : vector<1x64xf32>
    %116 = arith.subf %114, %115 : vector<1x64xf32>
    %117 = vector.broadcast %109 : vector<1x64xf32> to vector<8x64xf32>
    %118 = arith.subf %105, %117 : vector<8x64xf32>
    %cst_48 = arith.constant 9.99999974E-6 : f32
    %119 = vector.broadcast %cst_48 : f32 to vector<1x64xf32>
    %120 = arith.addf %116, %119 : vector<1x64xf32>
    %121 = math.rsqrt %120 : vector<1x64xf32>
    %122 = vector.broadcast %121 : vector<1x64xf32> to vector<8x64xf32>
    %123 = arith.mulf %118, %122 : vector<8x64xf32>
    %124 = vector.broadcast %97 : vector<1x64xf32> to vector<8x64xf32>
    %125 = arith.mulf %123, %124 : vector<8x64xf32>
    %126 = vector.broadcast %98 : vector<1x64xf32> to vector<8x64xf32>
    %127 = arith.addf %125, %126 : vector<8x64xf32>
    %c0_49 = arith.constant 0 : index
    %c3200 = arith.constant 3200 : index
    %128 = vector.load %arg5[%c0_49, %c3200] : memref<1x3328xf32, #tpu.memory_space<vmem>>, vector<1x64xf32>
    %129 = vector.broadcast %128 : vector<1x64xf32> to vector<8x64xf32>
    %130 = arith.mulf %127, %129 : vector<8x64xf32>
    %cst_50 = arith.constant dense<0.000000e+00> : vector<8xf32>
    %131 = vector.multi_reduction <add>, %130, %cst_50 [1] : vector<8x64xf32> to vector<8xf32>
    %132 = vector.shape_cast %131 : vector<8xf32> to vector<8x1xf32>
    %c0_51 = arith.constant 0 : index
    %c3072 = arith.constant 3072 : index
    %133 = vector.load %arg5[%c0_51, %c3072] : memref<1x3328xf32, #tpu.memory_space<vmem>>, vector<1x1xf32>
    %134 = vector.broadcast %133 : vector<1x1xf32> to vector<8x1xf32>
    %135 = arith.addf %132, %134 : vector<8x1xf32>
    %136 = arith.negf %135 : vector<8x1xf32>
    %137 = math.exp %136 : vector<8x1xf32>
    %cst_52 = arith.constant 1.000000e+00 : f32
    %138 = vector.broadcast %cst_52 : f32 to vector<8x1xf32>
    %139 = arith.addf %138, %137 : vector<8x1xf32>
    %140 = arith.divf %138, %139 : vector<8x1xf32>
    %c0_53 = arith.constant 0 : index
    %c0_54 = arith.constant 0 : index
    %141 = vector.load %arg6[%c0_53, %c0_54] : memref<8x1xf32, #tpu.memory_space<vmem>>, vector<8x1xf32>
    tpu.vector_store %arg6[%c0_53, %c0_54], %140 {strides = array<i32>} : memref<8x1xf32, #tpu.memory_space<vmem>>, vector<8x1xf32>,
    return
  }
}

</mosaic_0001>

<llo_original>
// kernel: sentiment_classifier.1
$region0: #{sentiment_classifier.1}
  #allocation0 [shape = 'u32[]', space=smem, size = 0x4, offset = 0x4, fixed_abs, tag = 'smem constant byte address 0x4 - core index']
  #allocation1 [shape = 'u32[72,128]{1,0:T(1,128)}', space=vmem, size = 0x9000, scoped, tag = 'internal scratch']
  %s0 = inlined_call_operand.vmem [shape: bf16[8,1024], index: 0, kind: input, shape index: {}]
  %s1 = inlined_call_operand.hbm [shape: bf16[1024,512], index: 1, kind: input, shape index: {}]
  %s2 = inlined_call_operand.hbm [shape: bf16[512,256], index: 2, kind: input, shape index: {}]
  %s3 = inlined_call_operand.vmem [shape: bf16[256,128], index: 3, kind: input, shape index: {}]
  %s4 = inlined_call_operand.vmem [shape: bf16[128,64], index: 4, kind: input, shape index: {}]
  %s5 = inlined_call_operand.vmem [shape: f32[1,3328], index: 5, kind: input, shape index: {}]
  %s6 = inlined_call_operand.vmem [shape: f32[8,1], index: 6, kind: output, shape index: {}]
  %s7 = sld [smem:[#allocation0]]
  $region42: #{sentiment_classifier.1} parent=0
    _
  %s9 = ssub.s32 1, %s7
  %s10 = scalar_select 0, %s9, %s7
  $region1: #{sentiment_classifier.1} parent=0
    #allocation2 [shape = 'u8[1048576]{0}', space=vmem, size = 0x100000, scoped, tag = 'input window, operand 1, single buffered']
    #allocation3 [shape = 's32[1]{0}', space=sflag, size = 0x4, scoped, tag = 'scoped memory for sentiment_classifier.1']
    #allocation4 [shape = 'u8[262144]{0}', space=vmem, size = 0x40000, scoped, tag = 'input window, operand 2, single buffered']
    #allocation5 [shape = 's32[1]{0}', space=sflag, size = 0x4, scoped, tag = 'scoped memory for sentiment_classifier.1']
    %11 = vsyncpa [#allocation3], 0
    %12 = vsyncpa [#allocation5], 0
    // Predicated region
    $region2: #{sentiment_classifier.1} parent=1 // pred_check
      _
    $region3: #{sentiment_classifier.1} parent=1 // pred_check_branch
      %14 = sbr.rel (0) target = $region5
    $region4: #{sentiment_classifier.1} parent=1 // pred_region
      _
    $region5: #{sentiment_classifier.1} parent=1 // pred_fallthru
      _
    // Predicated region
    $region6: #{sentiment_classifier.1} parent=1 // pred_check
      _
    $region7: #{sentiment_classifier.1} parent=1 // pred_check_branch
      %16 = sbr.rel (0) target = $region9
    $region8: #{sentiment_classifier.1} parent=1 // pred_region
      %18 = vsyncadd [#allocation3], 0
      %s19 = sshll.u32 %s1, 4
      %s20 = int_to_ptr.hbm [resolvable:$true] %s19
      %s21 = sshll.u32 [#allocation2], 4
      %s22 = int_to_ptr.vmem [resolvable:$true] %s21
      %27 = dma.hbm_to_vmem [thread:$0]  %s20, 32768, %s22, [#allocation3], 256, 256, 16
    $region9: #{sentiment_classifier.1} parent=1 // pred_fallthru
      _
    // Predicated region
    $region10: #{sentiment_classifier.1} parent=1 // pred_check
      _
    $region11: #{sentiment_classifier.1} parent=1 // pred_check_branch
      %29 = sbr.rel (0) target = $region13
    $region12: #{sentiment_classifier.1} parent=1 // pred_region
      %31 = vsyncadd [#allocation5], 0
      %s32 = sshll.u32 %s2, 4
      %s33 = int_to_ptr.hbm [resolvable:$true] %s32
      %s34 = sshll.u32 [#allocation4], 4
      %s35 = int_to_ptr.vmem [resolvable:$true] %s34
      %40 = dma.hbm_to_vmem [thread:$0]  %s33, 8192, %s35, [#allocation5], 128, 128, 8
    $region13: #{sentiment_classifier.1} parent=1 // pred_fallthru
      _
    // Predicated region
    $region14: #{sentiment_classifier.1} parent=1 // pred_check
      _
    $region15: #{sentiment_classifier.1} parent=1 // pred_check_branch
      %42 = sbr.rel (0) target = $region17
    $region16: #{sentiment_classifier.1} parent=1 // pred_region
      _
    $region17: #{sentiment_classifier.1} parent=1 // pred_fallthru
      _
    // Predicated region
    $region18: #{sentiment_classifier.1} parent=1 // pred_check
      _
    $region19: #{sentiment_classifier.1} parent=1 // pred_check_branch
      %44 = sbr.rel (0) target = $region21
    $region20: #{sentiment_classifier.1} parent=1 // pred_region
      _
    $region21: #{sentiment_classifier.1} parent=1 // pred_fallthru
      _
    // Predicated region
    $region22: #{sentiment_classifier.1} parent=1 // pred_check
      _
    $region23: #{sentiment_classifier.1} parent=1 // pred_check_branch
      %46 = sbr.rel (0) target = $region25
    $region24: #{sentiment_classifier.1} parent=1 // pred_region
      _
    $region25: #{sentiment_classifier.1} parent=1 // pred_fallthru
      _
    // Predicated region
    $region26: #{sentiment_classifier.1} parent=1 // pred_check
      _
    $region27: #{sentiment_classifier.1} parent=1 // pred_check_branch
      %48 = sbr.rel (0) target = $region29
    $region28: #{sentiment_classifier.1} parent=1 // pred_region
      %50 = dma.done [#allocation3], 32768
    $region29: #{sentiment_classifier.1} parent=1 // pred_fallthru
      _
    // Predicated region
    $region30: #{sentiment_classifier.1} parent=1 // pred_check
      _
    $region31: #{sentiment_classifier.1} parent=1 // pred_check_branch
      %52 = sbr.rel (0) target = $region33
    $region32: #{sentiment_classifier.1} parent=1 // pred_region
      %54 = dma.done [#allocation5], 8192
    $region33: #{sentiment_classifier.1} parent=1 // pred_fallthru
      _
    %v55 = vld [vmem:[%s0] sm:$0xff]
    %v56 = vld [vmem:[%s0 + $0x8] sm:$0xff]
    %v57 = vld [vmem:[%s0 + $0x10] sm:$0xff]
    %v58 = vld [vmem:[%s0 + $0x18] sm:$0xff]
    %v59 = vld [vmem:[%s5] sm:$0xf]
    %v60 = vld [vmem:[%s5 + $0x4] sm:$0xf]
    %v61 = vld [vmem:[%s5 + $0x8] sm:$0xf]
    %v62 = vld [vmem:[#allocation2] sm:$0xff]
    %v63 = vld [vmem:[#allocation2 + $0x8] sm:$0xff]
    %v64 = vld [vmem:[#allocation2 + $0x10] sm:$0xff]
    %v65 = vld [vmem:[#allocation2 + $0x18] sm:$0xff]
    %v66 = vld [vmem:[#allocation2 + $0x20] sm:$0xff]
    %v67 = vld [vmem:[#allocation2 + $0x28] sm:$0xff]
    %v68 = vld [vmem:[#allocation2 + $0x30] sm:$0xff]
    %v69 = vld [vmem:[#allocation2 + $0x38] sm:$0xff]
    %v70 = vld [vmem:[#allocation2 + $0x40] sm:$0xff]
    %v71 = vld [vmem:[#allocation2 + $0x48] sm:$0xff]
    %v72 = vld [vmem:[#allocation2 + $0x50] sm:$0xff]
    %v73 = vld [vmem:[#allocation2 + $0x58] sm:$0xff]
    %v74 = vld [vmem:[#allocation2 + $0x60] sm:$0xff]
    %v75 = vld [vmem:[#allocation2 + $0x68] sm:$0xff]
    %v76 = vld [vmem:[#allocation2 + $0x70] sm:$0xff]
    %v77 = vld [vmem:[#allocation2 + $0x78] sm:$0xff]
    %v78 = vld [vmem:[#allocation2 + $0x80] sm:$0xff]
    %v79 = vld [vmem:[#allocation2 + $0x88] sm:$0xff]
    %v80 = vld [vmem:[#allocation2 + $0x90] sm:$0xff]
    %v81 = vld [vmem:[#allocation2 + $0x98] sm:$0xff]
    %v82 = vld [vmem:[#allocation2 + $0xa0] sm:$0xff]
    %v83 = vld [vmem:[#allocation2 + $0xa8] sm:$0xff]
    %v84 = vld [vmem:[#allocation2 + $0xb0] sm:$0xff]
    %v85 = vld [vmem:[#allocation2 + $0xb8] sm:$0xff]
    %v86 = vld [vmem:[#allocation2 + $0xc0] sm:$0xff]
    %v87 = vld [vmem:[#allocation2 + $0xc8] sm:$0xff]
    %v88 = vld [vmem:[#allocation2 + $0xd0] sm:$0xff]
    %v89 = vld [vmem:[#allocation2 + $0xd8] sm:$0xff]
    %v90 = vld [vmem:[#allocation2 + $0xe0] sm:$0xff]
    %v91 = vld [vmem:[#allocation2 + $0xe8] sm:$0xff]
    %v92 = vld [vmem:[#allocation2 + $0xf0] sm:$0xff]
    %v93 = vld [vmem:[#allocation2 + $0xf8] sm:$0xff]
    %v94 = vld [vmem:[#allocation2 + $0x100] sm:$0xff]
    %v95 = vld [vmem:[#allocation2 + $0x108] sm:$0xff]
    %v96 = vld [vmem:[#allocation2 + $0x110] sm:$0xff]
    %v97 = vld [vmem:[#allocation2 + $0x118] sm:$0xff]
    %v98 = vld [vmem:[#allocation2 + $0x120] sm:$0xff]
    %v99 = vld [vmem:[#allocation2 + $0x128] sm:$0xff]
    %v100 = vld [vmem:[#allocation2 + $0x130] sm:$0xff]
    %v101 = vld [vmem:[#allocation2 + $0x138] sm:$0xff]
    %v102 = vld [vmem:[#allocation2 + $0x140] sm:$0xff]
    %v103 = vld [vmem:[#allocation2 + $0x148] sm:$0xff]
    %v104 = vld [vmem:[#allocation2 + $0x150] sm:$0xff]
    %v105 = vld [vmem:[#allocation2 + $0x158] sm:$0xff]
    %v106 = vld [vmem:[#allocation2 + $0x160] sm:$0xff]
    %v107 = vld [vmem:[#allocation2 + $0x168] sm:$0xff]
    %v108 = vld [vmem:[#allocation2 + $0x170] sm:$0xff]
    %v109 = vld [vmem:[#allocation2 + $0x178] sm:$0xff]
    %v110 = vld [vmem:[#allocation2 + $0x180] sm:$0xff]
    %v111 = vld [vmem:[#allocation2 + $0x188] sm:$0xff]
    %v112 = vld [vmem:[#allocation2 + $0x190] sm:$0xff]
    %v113 = vld [vmem:[#allocation2 + $0x198] sm:$0xff]
    %v114 = vld [vmem:[#allocation2 + $0x1a0] sm:$0xff]
    %v115 = vld [vmem:[#allocation2 + $0x1a8] sm:$0xff]
    %v116 = vld [vmem:[#allocation2 + $0x1b0] sm:$0xff]
    %v117 = vld [vmem:[#allocation2 + $0x1b8] sm:$0xff]
    %v118 = vld [vmem:[#allocation2 + $0x1c0] sm:$0xff]
    %v119 = vld [vmem:[#allocation2 + $0x1c8] sm:$0xff]
    %v120 = vld [vmem:[#allocation2 + $0x1d0] sm:$0xff]
    %v121 = vld [vmem:[#allocation2 + $0x1d8] sm:$0xff]
    %v122 = vld [vmem:[#allocation2 + $0x1e0] sm:$0xff]
    %v123 = vld [vmem:[#allocation2 + $0x1e8] sm:$0xff]
    %v124 = vld [vmem:[#allocation2 + $0x1f0] sm:$0xff]
    %v125 = vld [vmem:[#allocation2 + $0x1f8] sm:$0xff]
    %v126 = vld [vmem:[#allocation2 + $0x200] sm:$0xff]
    %v127 = vld [vmem:[#allocation2 + $0x208] sm:$0xff]
    %v128 = vld [vmem:[#allocation2 + $0x210] sm:$0xff]
    %v129 = vld [vmem:[#allocation2 + $0x218] sm:$0xff]
    %v130 = vld [vmem:[#allocation2 + $0x220] sm:$0xff]
    %v131 = vld [vmem:[#allocation2 + $0x228] sm:$0xff]
    %v132 = vld [vmem:[#allocation2 + $0x230] sm:$0xff]
    %v133 = vld [vmem:[#allocation2 + $0x238] sm:$0xff]
    %v134 = vld [vmem:[#allocation2 + $0x240] sm:$0xff]
    %v135 = vld [vmem:[#allocation2 + $0x248] sm:$0xff]
    %v136 = vld [vmem:[#allocation2 + $0x250] sm:$0xff]
    %v137 = vld [vmem:[#allocation2 + $0x258] sm:$0xff]
    %v138 = vld [vmem:[#allocation2 + $0x260] sm:$0xff]
    %v139 = vld [vmem:[#allocation2 + $0x268] sm:$0xff]
    %v140 = vld [vmem:[#allocation2 + $0x270] sm:$0xff]
    %v141 = vld [vmem:[#allocation2 + $0x278] sm:$0xff]
    %v142 = vld [vmem:[#allocation2 + $0x280] sm:$0xff]
    %v143 = vld [vmem:[#allocation2 + $0x288] sm:$0xff]
    %v144 = vld [vmem:[#allocation2 + $0x290] sm:$0xff]
    %v145 = vld [vmem:[#allocation2 + $0x298] sm:$0xff]
    %v146 = vld [vmem:[#allocation2 + $0x2a0] sm:$0xff]
    %v147 = vld [vmem:[#allocation2 + $0x2a8] sm:$0xff]
    %v148 = vld [vmem:[#allocation2 + $0x2b0] sm:$0xff]
    %v149 = vld [vmem:[#allocation2 + $0x2b8] sm:$0xff]
    %v150 = vld [vmem:[#allocation2 + $0x2c0] sm:$0xff]
    %v151 = vld [vmem:[#allocation2 + $0x2c8] sm:$0xff]
    %v152 = vld [vmem:[#allocation2 + $0x2d0] sm:$0xff]
    %v153 = vld [vmem:[#allocation2 + $0x2d8] sm:$0xff]
    %v154 = vld [vmem:[#allocation2 + $0x2e0] sm:$0xff]
    %v155 = vld [vmem:[#allocation2 + $0x2e8] sm:$0xff]
    %v156 = vld [vmem:[#allocation2 + $0x2f0] sm:$0xff]
    %v157 = vld [vmem:[#allocation2 + $0x2f8] sm:$0xff]
    %v158 = vld [vmem:[#allocation2 + $0x300] sm:$0xff]
    %v159 = vld [vmem:[#allocation2 + $0x308] sm:$0xff]
    %v160 = vld [vmem:[#allocation2 + $0x310] sm:$0xff]
    %v161 = vld [vmem:[#allocation2 + $0x318] sm:$0xff]
    %v162 = vld [vmem:[#allocation2 + $0x320] sm:$0xff]
    %v163 = vld [vmem:[#allocation2 + $0x328] sm:$0xff]
    %v164 = vld [vmem:[#allocation2 + $0x330] sm:$0xff]
    %v165 = vld [vmem:[#allocation2 + $0x338] sm:$0xff]
    %v166 = vld [vmem:[#allocation2 + $0x340] sm:$0xff]
    %v167 = vld [vmem:[#allocation2 + $0x348] sm:$0xff]
    %v168 = vld [vmem:[#allocation2 + $0x350] sm:$0xff]
    %v169 = vld [vmem:[#allocation2 + $0x358] sm:$0xff]
    %v170 = vld [vmem:[#allocation2 + $0x360] sm:$0xff]
    %v171 = vld [vmem:[#allocation2 + $0x368] sm:$0xff]
    %v172 = vld [vmem:[#allocation2 + $0x370] sm:$0xff]
    %v173 = vld [vmem:[#allocation2 + $0x378] sm:$0xff]
    %v174 = vld [vmem:[#allocation2 + $0x380] sm:$0xff]
    %v175 = vld [vmem:[#allocation2 + $0x388] sm:$0xff]
    %v176 = vld [vmem:[#allocation2 + $0x390] sm:$0xff]
    %v177 = vld [vmem:[#allocation2 + $0x398] sm:$0xff]
    %v178 = vld [vmem:[#allocation2 + $0x3a0] sm:$0xff]
    %v179 = vld [vmem:[#allocation2 + $0x3a8] sm:$0xff]
    %v180 = vld [vmem:[#allocation2 + $0x3b0] sm:$0xff]
    %v181 = vld [vmem:[#allocation2 + $0x3b8] sm:$0xff]
    %v182 = vld [vmem:[#allocation2 + $0x3c0] sm:$0xff]
    %v183 = vld [vmem:[#allocation2 + $0x3c8] sm:$0xff]
    %v184 = vld [vmem:[#allocation2 + $0x3d0] sm:$0xff]
    %v185 = vld [vmem:[#allocation2 + $0x3d8] sm:$0xff]
    %v186 = vld [vmem:[#allocation2 + $0x3e0] sm:$0xff]
    %v187 = vld [vmem:[#allocation2 + $0x3e8] sm:$0xff]
    %v188 = vld [vmem:[#allocation2 + $0x3f0] sm:$0xff]
    %v189 = vld [vmem:[#allocation2 + $0x3f8] sm:$0xff]
    %v190 = vld [vmem:[#allocation2 + $0x400] sm:$0xff]
    %v191 = vld [vmem:[#allocation2 + $0x408] sm:$0xff]
    %v192 = vld [vmem:[#allocation2 + $0x410] sm:$0xff]
    %v193 = vld [vmem:[#allocation2 + $0x418] sm:$0xff]
    %v194 = vld [vmem:[#allocation2 + $0x420] sm:$0xff]
    %v195 = vld [vmem:[#allocation2 + $0x428] sm:$0xff]
    %v196 = vld [vmem:[#allocation2 + $0x430] sm:$0xff]
    %v197 = vld [vmem:[#allocation2 + $0x438] sm:$0xff]
    %v198 = vld [vmem:[#allocation2 + $0x440] sm:$0xff]
    %v199 = vld [vmem:[#allocation2 + $0x448] sm:$0xff]
    %v200 = vld [vmem:[#allocation2 + $0x450] sm:$0xff]
    %v201 = vld [vmem:[#allocation2 + $0x458] sm:$0xff]
    %v202 = vld [vmem:[#allocation2 + $0x460] sm:$0xff]
    %v203 = vld [vmem:[#allocation2 + $0x468] sm:$0xff]
    %v204 = vld [vmem:[#allocation2 + $0x470] sm:$0xff]
    %v205 = vld [vmem:[#allocation2 + $0x478] sm:$0xff]
    %v206 = vld [vmem:[#allocation2 + $0x480] sm:$0xff]
    %v207 = vld [vmem:[#allocation2 + $0x488] sm:$0xff]
    %v208 = vld [vmem:[#allocation2 + $0x490] sm:$0xff]
    %v209 = vld [vmem:[#allocation2 + $0x498] sm:$0xff]
    %v210 = vld [vmem:[#allocation2 + $0x4a0] sm:$0xff]
    %v211 = vld [vmem:[#allocation2 + $0x4a8] sm:$0xff]
    %v212 = vld [vmem:[#allocation2 + $0x4b0] sm:$0xff]
    %v213 = vld [vmem:[#allocation2 + $0x4b8] sm:$0xff]
    %v214 = vld [vmem:[#allocation2 + $0x4c0] sm:$0xff]
    %v215 = vld [vmem:[#allocation2 + $0x4c8] sm:$0xff]
    %v216 = vld [vmem:[#allocation2 + $0x4d0] sm:$0xff]
    %v217 = vld [vmem:[#allocation2 + $0x4d8] sm:$0xff]
    %v218 = vld [vmem:[#allocation2 + $0x4e0] sm:$0xff]
    %v219 = vld [vmem:[#allocation2 + $0x4e8] sm:$0xff]
    %v220 = vld [vmem:[#allocation2 + $0x4f0] sm:$0xff]
    %v221 = vld [vmem:[#allocation2 + $0x4f8] sm:$0xff]
    %v222 = vld [vmem:[#allocation2 + $0x500] sm:$0xff]
    %v223 = vld [vmem:[#allocation2 + $0x508] sm:$0xff]
    %v224 = vld [vmem:[#allocation2 + $0x510] sm:$0xff]
    %v225 = vld [vmem:[#allocation2 + $0x518] sm:$0xff]
    %v226 = vld [vmem:[#allocation2 + $0x520] sm:$0xff]
    %v227 = vld [vmem:[#allocation2 + $0x528] sm:$0xff]
    %v228 = vld [vmem:[#allocation2 + $0x530] sm:$0xff]
    %v229 = vld [vmem:[#allocation2 + $0x538] sm:$0xff]
    %v230 = vld [vmem:[#allocation2 + $0x540] sm:$0xff]
    %v231 = vld [vmem:[#allocation2 + $0x548] sm:$0xff]
    %v232 = vld [vmem:[#allocation2 + $0x550] sm:$0xff]
    %v233 = vld [vmem:[#allocation2 + $0x558] sm:$0xff]
    %v234 = vld [vmem:[#allocation2 + $0x560] sm:$0xff]
    %v235 = vld [vmem:[#allocation2 + $0x568] sm:$0xff]
    %v236 = vld [vmem:[#allocation2 + $0x570] sm:$0xff]
    %v237 = vld [vmem:[#allocation2 + $0x578] sm:$0xff]
    %v238 = vld [vmem:[#allocation2 + $0x580] sm:$0xff]
    %v239 = vld [vmem:[#allocation2 + $0x588] sm:$0xff]
    %v240 = vld [vmem:[#allocation2 + $0x590] sm:$0xff]
    %v241 = vld [vmem:[#allocation2 + $0x598] sm:$0xff]
    %v242 = vld [vmem:[#allocation2 + $0x5a0] sm:$0xff]
    %v243 = vld [vmem:[#allocation2 + $0x5a8] sm:$0xff]
    %v244 = vld [vmem:[#allocation2 + $0x5b0] sm:$0xff]
    %v245 = vld [vmem:[#allocation2 + $0x5b8] sm:$0xff]
    %v246 = vld [vmem:[#allocation2 + $0x5c0] sm:$0xff]
    %v247 = vld [vmem:[#allocation2 + $0x5c8] sm:$0xff]
    %v248 = vld [vmem:[#allocation2 + $0x5d0] sm:$0xff]
    %v249 = vld [vmem:[#allocation2 + $0x5d8] sm:$0xff]
    %v250 = vld [vmem:[#allocation2 + $0x5e0] sm:$0xff]
    %v251 = vld [vmem:[#allocation2 + $0x5e8] sm:$0xff]
    %v252 = vld [vmem:[#allocation2 + $0x5f0] sm:$0xff]
    %v253 = vld [vmem:[#allocation2 + $0x5f8] sm:$0xff]
    %v254 = vld [vmem:[#allocation2 + $0x600] sm:$0xff]
    %v255 = vld [vmem:[#allocation2 + $0x608] sm:$0xff]
    %v256 = vld [vmem:[#allocation2 + $0x610] sm:$0xff]
    %v257 = vld [vmem:[#allocation2 + $0x618] sm:$0xff]
    %v258 = vld [vmem:[#allocation2 + $0x620] sm:$0xff]
    %v259 = vld [vmem:[#allocation2 + $0x628] sm:$0xff]
    %v260 = vld [vmem:[#allocation2 + $0x630] sm:$0xff]
    %v261 = vld [vmem:[#allocation2 + $0x638] sm:$0xff]
    %v262 = vld [vmem:[#allocation2 + $0x640] sm:$0xff]
    %v263 = vld [vmem:[#allocation2 + $0x648] sm:$0xff]
    %v264 = vld [vmem:[#allocation2 + $0x650] sm:$0xff]
    %v265 = vld [vmem:[#allocation2 + $0x658] sm:$0xff]
    %v266 = vld [vmem:[#allocation2 + $0x660] sm:$0xff]
    %v267 = vld [vmem:[#allocation2 + $0x668] sm:$0xff]
    %v268 = vld [vmem:[#allocation2 + $0x670] sm:$0xff]
    %v269 = vld [vmem:[#allocation2 + $0x678] sm:$0xff]
    %v270 = vld [vmem:[#allocation2 + $0x680] sm:$0xff]
    %v271 = vld [vmem:[#allocation2 + $0x688] sm:$0xff]
    %v272 = vld [vmem:[#allocation2 + $0x690] sm:$0xff]
    %v273 = vld [vmem:[#allocation2 + $0x698] sm:$0xff]
    %v274 = vld [vmem:[#allocation2 + $0x6a0] sm:$0xff]
    %v275 = vld [vmem:[#allocation2 + $0x6a8] sm:$0xff]
    %v276 = vld [vmem:[#allocation2 + $0x6b0] sm:$0xff]
    %v277 = vld [vmem:[#allocation2 + $0x6b8] sm:$0xff]
    %v278 = vld [vmem:[#allocation2 + $0x6c0] sm:$0xff]
    %v279 = vld [vmem:[#allocation2 + $0x6c8] sm:$0xff]
    %v280 = vld [vmem:[#allocation2 + $0x6d0] sm:$0xff]
    %v281 = vld [vmem:[#allocation2 + $0x6d8] sm:$0xff]
    %v282 = vld [vmem:[#allocation2 + $0x6e0] sm:$0xff]
    %v283 = vld [vmem:[#allocation2 + $0x6e8] sm:$0xff]
    %v284 = vld [vmem:[#allocation2 + $0x6f0] sm:$0xff]
    %v285 = vld [vmem:[#allocation2 + $0x6f8] sm:$0xff]
    %v286 = vld [vmem:[#allocation2 + $0x700] sm:$0xff]
    %v287 = vld [vmem:[#allocation2 + $0x708] sm:$0xff]
    %v288 = vld [vmem:[#allocation2 + $0x710] sm:$0xff]
    %v289 = vld [vmem:[#allocation2 + $0x718] sm:$0xff]
    %v290 = vld [vmem:[#allocation2 + $0x720] sm:$0xff]
    %v291 = vld [vmem:[#allocation2 + $0x728] sm:$0xff]
    %v292 = vld [vmem:[#allocation2 + $0x730] sm:$0xff]
    %v293 = vld [vmem:[#allocation2 + $0x738] sm:$0xff]
    %v294 = vld [vmem:[#allocation2 + $0x740] sm:$0xff]
    %v295 = vld [vmem:[#allocation2 + $0x748] sm:$0xff]
    %v296 = vld [vmem:[#allocation2 + $0x750] sm:$0xff]
    %v297 = vld [vmem:[#allocation2 + $0x758] sm:$0xff]
    %v298 = vld [vmem:[#allocation2 + $0x760] sm:$0xff]
    %v299 = vld [vmem:[#allocation2 + $0x768] sm:$0xff]
    %v300 = vld [vmem:[#allocation2 + $0x770] sm:$0xff]
    %v301 = vld [vmem:[#allocation2 + $0x778] sm:$0xff]
    %v302 = vld [vmem:[#allocation2 + $0x780] sm:$0xff]
    %v303 = vld [vmem:[#allocation2 + $0x788] sm:$0xff]
    %v304 = vld [vmem:[#allocation2 + $0x790] sm:$0xff]
    %v305 = vld [vmem:[#allocation2 + $0x798] sm:$0xff]
    %v306 = vld [vmem:[#allocation2 + $0x7a0] sm:$0xff]
    %v307 = vld [vmem:[#allocation2 + $0x7a8] sm:$0xff]
    %v308 = vld [vmem:[#allocation2 + $0x7b0] sm:$0xff]
    %v309 = vld [vmem:[#allocation2 + $0x7b8] sm:$0xff]
    %v310 = vld [vmem:[#allocation2 + $0x7c0] sm:$0xff]
    %v311 = vld [vmem:[#allocation2 + $0x7c8] sm:$0xff]
    %v312 = vld [vmem:[#allocation2 + $0x7d0] sm:$0xff]
    %v313 = vld [vmem:[#allocation2 + $0x7d8] sm:$0xff]
    %v314 = vld [vmem:[#allocation2 + $0x7e0] sm:$0xff]
    %v315 = vld [vmem:[#allocation2 + $0x7e8] sm:$0xff]
    %v316 = vld [vmem:[#allocation2 + $0x7f0] sm:$0xff]
    %v317 = vld [vmem:[#allocation2 + $0x7f8] sm:$0xff]
    %v319 = vperm.slane %v59, 0
    %v320 = vperm.slane %v59, 1
    %v321 = vperm.slane %v59, 2
    %v322 = vperm.slane %v59, 3
    %v331 = vunpack.c.l.b16 %v55
    %v332 = vunpack.c.h.b16 %v55
    %v333 = vunpack.c.l.b16 %v56
    %v334 = vunpack.c.h.b16 %v56
    %v335 = vunpack.c.l.b16 %v57
    %v336 = vunpack.c.h.b16 %v57
    %v337 = vunpack.c.l.b16 %v58
    %v338 = vunpack.c.h.b16 %v58
    %v339 = vpack.c.b16 %v331, %v331
    %v340 = vpack.c.b16 %v332, %v332
    %v341 = vpack.c.b16 %v333, %v333
    %v342 = vpack.c.b16 %v334, %v334
    %v343 = vpack.c.b16 %v335, %v335
    %v344 = vpack.c.b16 %v336, %v336
    %v345 = vpack.c.b16 %v337, %v337
    %v346 = vpack.c.b16 %v338, %v338
    %v611 = vunpack.c.l.b16 %v62
    %v612 = vunpack.c.h.b16 %v62
    %v613 = vunpack.c.l.b16 %v63
    %v614 = vunpack.c.h.b16 %v63
    %v615 = vunpack.c.l.b16 %v64
    %v616 = vunpack.c.h.b16 %v64
    %v617 = vunpack.c.l.b16 %v65
    %v618 = vunpack.c.h.b16 %v65
    %v619 = vunpack.c.l.b16 %v66
    %v620 = vunpack.c.h.b16 %v66
    %v621 = vunpack.c.l.b16 %v67
    %v622 = vunpack.c.h.b16 %v67
    %v623 = vunpack.c.l.b16 %v68
    %v624 = vunpack.c.h.b16 %v68
    %v625 = vunpack.c.l.b16 %v69
    %v626 = vunpack.c.h.b16 %v69
    %v627 = vunpack.c.l.b16 %v70
    %v628 = vunpack.c.h.b16 %v70
    %v629 = vunpack.c.l.b16 %v71
    %v630 = vunpack.c.h.b16 %v71
    %v631 = vunpack.c.l.b16 %v72
    %v632 = vunpack.c.h.b16 %v72
    %v633 = vunpack.c.l.b16 %v73
    %v634 = vunpack.c.h.b16 %v73
    %v635 = vunpack.c.l.b16 %v74
    %v636 = vunpack.c.h.b16 %v74
    %v637 = vunpack.c.l.b16 %v75
    %v638 = vunpack.c.h.b16 %v75
    %v639 = vunpack.c.l.b16 %v76
    %v640 = vunpack.c.h.b16 %v76
    %v641 = vunpack.c.l.b16 %v77
    %v642 = vunpack.c.h.b16 %v77
    %v643 = vunpack.c.l.b16 %v78
    %v644 = vunpack.c.h.b16 %v78
    %v645 = vunpack.c.l.b16 %v79
    %v646 = vunpack.c.h.b16 %v79
    %v647 = vunpack.c.l.b16 %v80
    %v648 = vunpack.c.h.b16 %v80
    %v649 = vunpack.c.l.b16 %v81
    %v650 = vunpack.c.h.b16 %v81
    %v651 = vunpack.c.l.b16 %v82
    %v652 = vunpack.c.h.b16 %v82
    %v653 = vunpack.c.l.b16 %v83
    %v654 = vunpack.c.h.b16 %v83
    %v655 = vunpack.c.l.b16 %v84
    %v656 = vunpack.c.h.b16 %v84
    %v657 = vunpack.c.l.b16 %v85
    %v658 = vunpack.c.h.b16 %v85
    %v659 = vunpack.c.l.b16 %v86
    %v660 = vunpack.c.h.b16 %v86
    %v661 = vunpack.c.l.b16 %v87
    %v662 = vunpack.c.h.b16 %v87
    %v663 = vunpack.c.l.b16 %v88
    %v664 = vunpack.c.h.b16 %v88
    %v665 = vunpack.c.l.b16 %v89
    %v666 = vunpack.c.h.b16 %v89
    %v667 = vunpack.c.l.b16 %v90
    %v668 = vunpack.c.h.b16 %v90
    %v669 = vunpack.c.l.b16 %v91
    %v670 = vunpack.c.h.b16 %v91
    %v671 = vunpack.c.l.b16 %v92
    %v672 = vunpack.c.h.b16 %v92
    %v673 = vunpack.c.l.b16 %v93
    %v674 = vunpack.c.h.b16 %v93
    %v675 = vunpack.c.l.b16 %v94
    %v676 = vunpack.c.h.b16 %v94
    %v677 = vunpack.c.l.b16 %v95
    %v678 = vunpack.c.h.b16 %v95
    %v679 = vunpack.c.l.b16 %v96
    %v680 = vunpack.c.h.b16 %v96
    %v681 = vunpack.c.l.b16 %v97
    %v682 = vunpack.c.h.b16 %v97
    %v683 = vunpack.c.l.b16 %v98
    %v684 = vunpack.c.h.b16 %v98
    %v685 = vunpack.c.l.b16 %v99
    %v686 = vunpack.c.h.b16 %v99
    %v687 = vunpack.c.l.b16 %v100
    %v688 = vunpack.c.h.b16 %v100
    %v689 = vunpack.c.l.b16 %v101
    %v690 = vunpack.c.h.b16 %v101
    %v691 = vunpack.c.l.b16 %v102
    %v692 = vunpack.c.h.b16 %v102
    %v693 = vunpack.c.l.b16 %v103
    %v694 = vunpack.c.h.b16 %v103
    %v695 = vunpack.c.l.b16 %v104
    %v696 = vunpack.c.h.b16 %v104
    %v697 = vunpack.c.l.b16 %v105
    %v698 = vunpack.c.h.b16 %v105
    %v699 = vunpack.c.l.b16 %v106
    %v700 = vunpack.c.h.b16 %v106
    %v701 = vunpack.c.l.b16 %v107
    %v702 = vunpack.c.h.b16 %v107
    %v703 = vunpack.c.l.b16 %v108
    %v704 = vunpack.c.h.b16 %v108
    %v705 = vunpack.c.l.b16 %v109
    %v706 = vunpack.c.h.b16 %v109
    %v707 = vunpack.c.l.b16 %v110
    %v708 = vunpack.c.h.b16 %v110
    %v709 = vunpack.c.l.b16 %v111
    %v710 = vunpack.c.h.b16 %v111
    %v711 = vunpack.c.l.b16 %v112
    %v712 = vunpack.c.h.b16 %v112
    %v713 = vunpack.c.l.b16 %v113
    %v714 = vunpack.c.h.b16 %v113
    %v715 = vunpack.c.l.b16 %v114
    %v716 = vunpack.c.h.b16 %v114
    %v717 = vunpack.c.l.b16 %v115
    %v718 = vunpack.c.h.b16 %v115
    %v719 = vunpack.c.l.b16 %v116
    %v720 = vunpack.c.h.b16 %v116
    %v721 = vunpack.c.l.b16 %v117
    %v722 = vunpack.c.h.b16 %v117
    %v723 = vunpack.c.l.b16 %v118
    %v724 = vunpack.c.h.b16 %v118
    %v725 = vunpack.c.l.b16 %v119
    %v726 = vunpack.c.h.b16 %v119
    %v727 = vunpack.c.l.b16 %v120
    %v728 = vunpack.c.h.b16 %v120
    %v729 = vunpack.c.l.b16 %v121
    %v730 = vunpack.c.h.b16 %v121
    %v731 = vunpack.c.l.b16 %v122
    %v732 = vunpack.c.h.b16 %v122
    %v733 = vunpack.c.l.b16 %v123
    %v734 = vunpack.c.h.b16 %v123
    %v735 = vunpack.c.l.b16 %v124
    %v736 = vunpack.c.h.b16 %v124
    %v737 = vunpack.c.l.b16 %v125
    %v738 = vunpack.c.h.b16 %v125
    %v739 = vunpack.c.l.b16 %v126
    %v740 = vunpack.c.h.b16 %v126
    %v741 = vunpack.c.l.b16 %v127
    %v742 = vunpack.c.h.b16 %v127
    %v743 = vunpack.c.l.b16 %v128
    %v744 = vunpack.c.h.b16 %v128
    %v745 = vunpack.c.l.b16 %v129
    %v746 = vunpack.c.h.b16 %v129
    %v747 = vunpack.c.l.b16 %v130
    %v748 = vunpack.c.h.b16 %v130
    %v749 = vunpack.c.l.b16 %v131
    %v750 = vunpack.c.h.b16 %v131
    %v751 = vunpack.c.l.b16 %v132
    %v752 = vunpack.c.h.b16 %v132
    %v753 = vunpack.c.l.b16 %v133
    %v754 = vunpack.c.h.b16 %v133
    %v755 = vunpack.c.l.b16 %v134
    %v756 = vunpack.c.h.b16 %v134
    %v757 = vunpack.c.l.b16 %v135
    %v758 = vunpack.c.h.b16 %v135
    %v759 = vunpack.c.l.b16 %v136
    %v760 = vunpack.c.h.b16 %v136
    %v761 = vunpack.c.l.b16 %v137
    %v762 = vunpack.c.h.b16 %v137
    %v763 = vunpack.c.l.b16 %v138
    %v764 = vunpack.c.h.b16 %v138
    %v765 = vunpack.c.l.b16 %v139
    %v766 = vunpack.c.h.b16 %v139
    %v767 = vunpack.c.l.b16 %v140
    %v768 = vunpack.c.h.b16 %v140
    %v769 = vunpack.c.l.b16 %v141
    %v770 = vunpack.c.h.b16 %v141
    %v771 = vunpack.c.l.b16 %v142
    %v772 = vunpack.c.h.b16 %v142
    %v773 = vunpack.c.l.b16 %v143
    %v774 = vunpack.c.h.b16 %v143
    %v775 = vunpack.c.l.b16 %v144
    %v776 = vunpack.c.h.b16 %v144
    %v777 = vunpack.c.l.b16 %v145
    %v778 = vunpack.c.h.b16 %v145
    %v779 = vunpack.c.l.b16 %v146
    %v780 = vunpack.c.h.b16 %v146
    %v781 = vunpack.c.l.b16 %v147
    %v782 = vunpack.c.h.b16 %v147
    %v783 = vunpack.c.l.b16 %v148
    %v784 = vunpack.c.h.b16 %v148
    %v785 = vunpack.c.l.b16 %v149
    %v786 = vunpack.c.h.b16 %v149
    %v787 = vunpack.c.l.b16 %v150
    %v788 = vunpack.c.h.b16 %v150
    %v789 = vunpack.c.l.b16 %v151
    %v790 = vunpack.c.h.b16 %v151
    %v791 = vunpack.c.l.b16 %v152
    %v792 = vunpack.c.h.b16 %v152
    %v793 = vunpack.c.l.b16 %v153
    %v794 = vunpack.c.h.b16 %v153
    %v795 = vunpack.c.l.b16 %v154
    %v796 = vunpack.c.h.b16 %v154
    %v797 = vunpack.c.l.b16 %v155
    %v798 = vunpack.c.h.b16 %v155
    %v799 = vunpack.c.l.b16 %v156
    %v800 = vunpack.c.h.b16 %v156
    %v801 = vunpack.c.l.b16 %v157
    %v802 = vunpack.c.h.b16 %v157
    %v803 = vunpack.c.l.b16 %v158
    %v804 = vunpack.c.h.b16 %v158
    %v805 = vunpack.c.l.b16 %v159
    %v806 = vunpack.c.h.b16 %v159
    %v807 = vunpack.c.l.b16 %v160
    %v808 = vunpack.c.h.b16 %v160
    %v809 = vunpack.c.l.b16 %v161
    %v810 = vunpack.c.h.b16 %v161
    %v811 = vunpack.c.l.b16 %v162
    %v812 = vunpack.c.h.b16 %v162
    %v813 = vunpack.c.l.b16 %v163
    %v814 = vunpack.c.h.b16 %v163
    %v815 = vunpack.c.l.b16 %v164
    %v816 = vunpack.c.h.b16 %v164
    %v817 = vunpack.c.l.b16 %v165
    %v818 = vunpack.c.h.b16 %v165
    %v819 = vunpack.c.l.b16 %v166
    %v820 = vunpack.c.h.b16 %v166
    %v821 = vunpack.c.l.b16 %v167
    %v822 = vunpack.c.h.b16 %v167
    %v823 = vunpack.c.l.b16 %v168
    %v824 = vunpack.c.h.b16 %v168
    %v825 = vunpack.c.l.b16 %v169
    %v826 = vunpack.c.h.b16 %v169
    %v827 = vunpack.c.l.b16 %v170
    %v828 = vunpack.c.h.b16 %v170
    %v829 = vunpack.c.l.b16 %v171
    %v830 = vunpack.c.h.b16 %v171
    %v831 = vunpack.c.l.b16 %v172
    %v832 = vunpack.c.h.b16 %v172
    %v833 = vunpack.c.l.b16 %v173
    %v834 = vunpack.c.h.b16 %v173
    %v835 = vunpack.c.l.b16 %v174
    %v836 = vunpack.c.h.b16 %v174
    %v837 = vunpack.c.l.b16 %v175
    %v838 = vunpack.c.h.b16 %v175
    %v839 = vunpack.c.l.b16 %v176
    %v840 = vunpack.c.h.b16 %v176
    %v841 = vunpack.c.l.b16 %v177
    %v842 = vunpack.c.h.b16 %v177
    %v843 = vunpack.c.l.b16 %v178
    %v844 = vunpack.c.h.b16 %v178
    %v845 = vunpack.c.l.b16 %v179
    %v846 = vunpack.c.h.b16 %v179
    %v847 = vunpack.c.l.b16 %v180
    %v848 = vunpack.c.h.b16 %v180
    %v849 = vunpack.c.l.b16 %v181
    %v850 = vunpack.c.h.b16 %v181
    %v851 = vunpack.c.l.b16 %v182
    %v852 = vunpack.c.h.b16 %v182
    %v853 = vunpack.c.l.b16 %v183
    %v854 = vunpack.c.h.b16 %v183
    %v855 = vunpack.c.l.b16 %v184
    %v856 = vunpack.c.h.b16 %v184
    %v857 = vunpack.c.l.b16 %v185
    %v858 = vunpack.c.h.b16 %v185
    %v859 = vunpack.c.l.b16 %v186
    %v860 = vunpack.c.h.b16 %v186
    %v861 = vunpack.c.l.b16 %v187
    %v862 = vunpack.c.h.b16 %v187
    %v863 = vunpack.c.l.b16 %v188
    %v864 = vunpack.c.h.b16 %v188
    %v865 = vunpack.c.l.b16 %v189
    %v866 = vunpack.c.h.b16 %v189
    %v867 = vunpack.c.l.b16 %v190
    %v868 = vunpack.c.h.b16 %v190
    %v869 = vunpack.c.l.b16 %v191
    %v870 = vunpack.c.h.b16 %v191
    %v871 = vunpack.c.l.b16 %v192
    %v872 = vunpack.c.h.b16 %v192
    %v873 = vunpack.c.l.b16 %v193
    %v874 = vunpack.c.h.b16 %v193
    %v875 = vunpack.c.l.b16 %v194
    %v876 = vunpack.c.h.b16 %v194
    %v877 = vunpack.c.l.b16 %v195
    %v878 = vunpack.c.h.b16 %v195
    %v879 = vunpack.c.l.b16 %v196
    %v880 = vunpack.c.h.b16 %v196
    %v881 = vunpack.c.l.b16 %v197
    %v882 = vunpack.c.h.b16 %v197
    %v883 = vunpack.c.l.b16 %v198
    %v884 = vunpack.c.h.b16 %v198
    %v885 = vunpack.c.l.b16 %v199
    %v886 = vunpack.c.h.b16 %v199
    %v887 = vunpack.c.l.b16 %v200
    %v888 = vunpack.c.h.b16 %v200
    %v889 = vunpack.c.l.b16 %v201
    %v890 = vunpack.c.h.b16 %v201
    %v891 = vunpack.c.l.b16 %v202
    %v892 = vunpack.c.h.b16 %v202
    %v893 = vunpack.c.l.b16 %v203
    %v894 = vunpack.c.h.b16 %v203
    %v895 = vunpack.c.l.b16 %v204
    %v896 = vunpack.c.h.b16 %v204
    %v897 = vunpack.c.l.b16 %v205
    %v898 = vunpack.c.h.b16 %v205
    %v899 = vunpack.c.l.b16 %v206
    %v900 = vunpack.c.h.b16 %v206
    %v901 = vunpack.c.l.b16 %v207
    %v902 = vunpack.c.h.b16 %v207
    %v903 = vunpack.c.l.b16 %v208
    %v904 = vunpack.c.h.b16 %v208
    %v905 = vunpack.c.l.b16 %v209
    %v906 = vunpack.c.h.b16 %v209
    %v907 = vunpack.c.l.b16 %v210
    %v908 = vunpack.c.h.b16 %v210
    %v909 = vunpack.c.l.b16 %v211
    %v910 = vunpack.c.h.b16 %v211
    %v911 = vunpack.c.l.b16 %v212
    %v912 = vunpack.c.h.b16 %v212
    %v913 = vunpack.c.l.b16 %v213
    %v914 = vunpack.c.h.b16 %v213
    %v915 = vunpack.c.l.b16 %v214
    %v916 = vunpack.c.h.b16 %v214
    %v917 = vunpack.c.l.b16 %v215
    %v918 = vunpack.c.h.b16 %v215
    %v919 = vunpack.c.l.b16 %v216
    %v920 = vunpack.c.h.b16 %v216
    %v921 = vunpack.c.l.b16 %v217
    %v922 = vunpack.c.h.b16 %v217
    %v923 = vunpack.c.l.b16 %v218
    %v924 = vunpack.c.h.b16 %v218
    %v925 = vunpack.c.l.b16 %v219
    %v926 = vunpack.c.h.b16 %v219
    %v927 = vunpack.c.l.b16 %v220
    %v928 = vunpack.c.h.b16 %v220
    %v929 = vunpack.c.l.b16 %v221
    %v930 = vunpack.c.h.b16 %v221
    %v931 = vunpack.c.l.b16 %v222
    %v932 = vunpack.c.h.b16 %v222
    %v933 = vunpack.c.l.b16 %v223
    %v934 = vunpack.c.h.b16 %v223
    %v935 = vunpack.c.l.b16 %v224
    %v936 = vunpack.c.h.b16 %v224
    %v937 = vunpack.c.l.b16 %v225
    %v938 = vunpack.c.h.b16 %v225
    %v939 = vunpack.c.l.b16 %v226
    %v940 = vunpack.c.h.b16 %v226
    %v941 = vunpack.c.l.b16 %v227
    %v942 = vunpack.c.h.b16 %v227
    %v943 = vunpack.c.l.b16 %v228
    %v944 = vunpack.c.h.b16 %v228
    %v945 = vunpack.c.l.b16 %v229
    %v946 = vunpack.c.h.b16 %v229
    %v947 = vunpack.c.l.b16 %v230
    %v948 = vunpack.c.h.b16 %v230
    %v949 = vunpack.c.l.b16 %v231
    %v950 = vunpack.c.h.b16 %v231
    %v951 = vunpack.c.l.b16 %v232
    %v952 = vunpack.c.h.b16 %v232
    %v953 = vunpack.c.l.b16 %v233
    %v954 = vunpack.c.h.b16 %v233
    %v955 = vunpack.c.l.b16 %v234
    %v956 = vunpack.c.h.b16 %v234
    %v957 = vunpack.c.l.b16 %v235
    %v958 = vunpack.c.h.b16 %v235
    %v959 = vunpack.c.l.b16 %v236
    %v960 = vunpack.c.h.b16 %v236
    %v961 = vunpack.c.l.b16 %v237
    %v962 = vunpack.c.h.b16 %v237
    %v963 = vunpack.c.l.b16 %v238
    %v964 = vunpack.c.h.b16 %v238
    %v965 = vunpack.c.l.b16 %v239
    %v966 = vunpack.c.h.b16 %v239
    %v967 = vunpack.c.l.b16 %v240
    %v968 = vunpack.c.h.b16 %v240
    %v969 = vunpack.c.l.b16 %v241
    %v970 = vunpack.c.h.b16 %v241
    %v971 = vunpack.c.l.b16 %v242
    %v972 = vunpack.c.h.b16 %v242
    %v973 = vunpack.c.l.b16 %v243
    %v974 = vunpack.c.h.b16 %v243
    %v975 = vunpack.c.l.b16 %v244
    %v976 = vunpack.c.h.b16 %v244
    %v977 = vunpack.c.l.b16 %v245
    %v978 = vunpack.c.h.b16 %v245
    %v979 = vunpack.c.l.b16 %v246
    %v980 = vunpack.c.h.b16 %v246
    %v981 = vunpack.c.l.b16 %v247
    %v982 = vunpack.c.h.b16 %v247
    %v983 = vunpack.c.l.b16 %v248
    %v984 = vunpack.c.h.b16 %v248
    %v985 = vunpack.c.l.b16 %v249
    %v986 = vunpack.c.h.b16 %v249
    %v987 = vunpack.c.l.b16 %v250
    %v988 = vunpack.c.h.b16 %v250
    %v989 = vunpack.c.l.b16 %v251
    %v990 = vunpack.c.h.b16 %v251
    %v991 = vunpack.c.l.b16 %v252
    %v992 = vunpack.c.h.b16 %v252
    %v993 = vunpack.c.l.b16 %v253
    %v994 = vunpack.c.h.b16 %v253
    %v995 = vunpack.c.l.b16 %v254
    %v996 = vunpack.c.h.b16 %v254
    %v997 = vunpack.c.l.b16 %v255
    %v998 = vunpack.c.h.b16 %v255
    %v999 = vunpack.c.l.b16 %v256
    %v1000 = vunpack.c.h.b16 %v256
    %v1001 = vunpack.c.l.b16 %v257
    %v1002 = vunpack.c.h.b16 %v257
    %v1003 = vunpack.c.l.b16 %v258
    %v1004 = vunpack.c.h.b16 %v258
    %v1005 = vunpack.c.l.b16 %v259
    %v1006 = vunpack.c.h.b16 %v259
    %v1007 = vunpack.c.l.b16 %v260
    %v1008 = vunpack.c.h.b16 %v260
    %v1009 = vunpack.c.l.b16 %v261
    %v1010 = vunpack.c.h.b16 %v261
    %v1011 = vunpack.c.l.b16 %v262
    %v1012 = vunpack.c.h.b16 %v262
    %v1013 = vunpack.c.l.b16 %v263
    %v1014 = vunpack.c.h.b16 %v263
    %v1015 = vunpack.c.l.b16 %v264
    %v1016 = vunpack.c.h.b16 %v264
    %v1017 = vunpack.c.l.b16 %v265
    %v1018 = vunpack.c.h.b16 %v265
    %v1019 = vunpack.c.l.b16 %v266
    %v1020 = vunpack.c.h.b16 %v266
    %v1021 = vunpack.c.l.b16 %v267
    %v1022 = vunpack.c.h.b16 %v267
    %v1023 = vunpack.c.l.b16 %v268
    %v1024 = vunpack.c.h.b16 %v268
    %v1025 = vunpack.c.l.b16 %v269
    %v1026 = vunpack.c.h.b16 %v269
    %v1027 = vunpack.c.l.b16 %v270
    %v1028 = vunpack.c.h.b16 %v270
    %v1029 = vunpack.c.l.b16 %v271
    %v1030 = vunpack.c.h.b16 %v271
    %v1031 = vunpack.c.l.b16 %v272
    %v1032 = vunpack.c.h.b16 %v272
    %v1033 = vunpack.c.l.b16 %v273
    %v1034 = vunpack.c.h.b16 %v273
    %v1035 = vunpack.c.l.b16 %v274
    %v1036 = vunpack.c.h.b16 %v274
    %v1037 = vunpack.c.l.b16 %v275
    %v1038 = vunpack.c.h.b16 %v275
    %v1039 = vunpack.c.l.b16 %v276
    %v1040 = vunpack.c.h.b16 %v276
    %v1041 = vunpack.c.l.b16 %v277
    %v1042 = vunpack.c.h.b16 %v277
    %v1043 = vunpack.c.l.b16 %v278
    %v1044 = vunpack.c.h.b16 %v278
    %v1045 = vunpack.c.l.b16 %v279
    %v1046 = vunpack.c.h.b16 %v279
    %v1047 = vunpack.c.l.b16 %v280
    %v1048 = vunpack.c.h.b16 %v280
    %v1049 = vunpack.c.l.b16 %v281
    %v1050 = vunpack.c.h.b16 %v281
    %v1051 = vunpack.c.l.b16 %v282
    %v1052 = vunpack.c.h.b16 %v282
    %v1053 = vunpack.c.l.b16 %v283
    %v1054 = vunpack.c.h.b16 %v283
    %v1055 = vunpack.c.l.b16 %v284
    %v1056 = vunpack.c.h.b16 %v284
    %v1057 = vunpack.c.l.b16 %v285
    %v1058 = vunpack.c.h.b16 %v285
    %v1059 = vunpack.c.l.b16 %v286
    %v1060 = vunpack.c.h.b16 %v286
    %v1061 = vunpack.c.l.b16 %v287
    %v1062 = vunpack.c.h.b16 %v287
    %v1063 = vunpack.c.l.b16 %v288
    %v1064 = vunpack.c.h.b16 %v288
    %v1065 = vunpack.c.l.b16 %v289
    %v1066 = vunpack.c.h.b16 %v289
    %v1067 = vunpack.c.l.b16 %v290
    %v1068 = vunpack.c.h.b16 %v290
    %v1069 = vunpack.c.l.b16 %v291
    %v1070 = vunpack.c.h.b16 %v291
    %v1071 = vunpack.c.l.b16 %v292
    %v1072 = vunpack.c.h.b16 %v292
    %v1073 = vunpack.c.l.b16 %v293
    %v1074 = vunpack.c.h.b16 %v293
    %v1075 = vunpack.c.l.b16 %v294
    %v1076 = vunpack.c.h.b16 %v294
    %v1077 = vunpack.c.l.b16 %v295
    %v1078 = vunpack.c.h.b16 %v295
    %v1079 = vunpack.c.l.b16 %v296
    %v1080 = vunpack.c.h.b16 %v296
    %v1081 = vunpack.c.l.b16 %v297
    %v1082 = vunpack.c.h.b16 %v297
    %v1083 = vunpack.c.l.b16 %v298
    %v1084 = vunpack.c.h.b16 %v298
    %v1085 = vunpack.c.l.b16 %v299
    %v1086 = vunpack.c.h.b16 %v299
    %v1087 = vunpack.c.l.b16 %v300
    %v1088 = vunpack.c.h.b16 %v300
    %v1089 = vunpack.c.l.b16 %v301
    %v1090 = vunpack.c.h.b16 %v301
    %v1091 = vunpack.c.l.b16 %v302
    %v1092 = vunpack.c.h.b16 %v302
    %v1093 = vunpack.c.l.b16 %v303
    %v1094 = vunpack.c.h.b16 %v303
    %v1095 = vunpack.c.l.b16 %v304
    %v1096 = vunpack.c.h.b16 %v304
    %v1097 = vunpack.c.l.b16 %v305
    %v1098 = vunpack.c.h.b16 %v305
    %v1099 = vunpack.c.l.b16 %v306
    %v1100 = vunpack.c.h.b16 %v306
    %v1101 = vunpack.c.l.b16 %v307
    %v1102 = vunpack.c.h.b16 %v307
    %v1103 = vunpack.c.l.b16 %v308
    %v1104 = vunpack.c.h.b16 %v308
    %v1105 = vunpack.c.l.b16 %v309
    %v1106 = vunpack.c.h.b16 %v309
    %v1107 = vunpack.c.l.b16 %v310
    %v1108 = vunpack.c.h.b16 %v310
    %v1109 = vunpack.c.l.b16 %v311
    %v1110 = vunpack.c.h.b16 %v311
    %v1111 = vunpack.c.l.b16 %v312
    %v1112 = vunpack.c.h.b16 %v312
    %v1113 = vunpack.c.l.b16 %v313
    %v1114 = vunpack.c.h.b16 %v313
    %v1115 = vunpack.c.l.b16 %v314
    %v1116 = vunpack.c.h.b16 %v314
    %v1117 = vunpack.c.l.b16 %v315
    %v1118 = vunpack.c.h.b16 %v315
    %v1119 = vunpack.c.l.b16 %v316
    %v1120 = vunpack.c.h.b16 %v316
    %v1121 = vunpack.c.l.b16 %v317
    %v1122 = vunpack.c.h.b16 %v317
    %v1123 = vpack.c.b16 %v615, %v611
    %v1124 = vpack.c.b16 %v616, %v612
    %v1125 = vpack.c.b16 %v617, %v613
    %v1126 = vpack.c.b16 %v618, %v614
    %v1127 = vpack.c.b16 %v623, %v619
    %v1128 = vpack.c.b16 %v624, %v620
    %v1129 = vpack.c.b16 %v625, %v621
    %v1130 = vpack.c.b16 %v626, %v622
    %v1131 = vpack.c.b16 %v631, %v627
    %v1132 = vpack.c.b16 %v632, %v628
    %v1133 = vpack.c.b16 %v633, %v629
    %v1134 = vpack.c.b16 %v634, %v630
    %v1135 = vpack.c.b16 %v639, %v635
    %v1136 = vpack.c.b16 %v640, %v636
    %v1137 = vpack.c.b16 %v641, %v637
    %v1138 = vpack.c.b16 %v642, %v638
    %v1139 = vpack.c.b16 %v647, %v643
    %v1140 = vpack.c.b16 %v648, %v644
    %v1141 = vpack.c.b16 %v649, %v645
    %v1142 = vpack.c.b16 %v650, %v646
    %v1143 = vpack.c.b16 %v655, %v651
    %v1144 = vpack.c.b16 %v656, %v652
    %v1145 = vpack.c.b16 %v657, %v653
    %v1146 = vpack.c.b16 %v658, %v654
    %v1147 = vpack.c.b16 %v663, %v659
    %v1148 = vpack.c.b16 %v664, %v660
    %v1149 = vpack.c.b16 %v665, %v661
    %v1150 = vpack.c.b16 %v666, %v662
    %v1151 = vpack.c.b16 %v671, %v667
    %v1152 = vpack.c.b16 %v672, %v668
    %v1153 = vpack.c.b16 %v673, %v669
    %v1154 = vpack.c.b16 %v674, %v670
    %v1155 = vpack.c.b16 %v679, %v675
    %v1156 = vpack.c.b16 %v680, %v676
    %v1157 = vpack.c.b16 %v681, %v677
    %v1158 = vpack.c.b16 %v682, %v678
    %v1159 = vpack.c.b16 %v687, %v683
    %v1160 = vpack.c.b16 %v688, %v684
    %v1161 = vpack.c.b16 %v689, %v685
    %v1162 = vpack.c.b16 %v690, %v686
    %v1163 = vpack.c.b16 %v695, %v691
    %v1164 = vpack.c.b16 %v696, %v692
    %v1165 = vpack.c.b16 %v697, %v693
    %v1166 = vpack.c.b16 %v698, %v694
    %v1167 = vpack.c.b16 %v703, %v699
    %v1168 = vpack.c.b16 %v704, %v700
    %v1169 = vpack.c.b16 %v705, %v701
    %v1170 = vpack.c.b16 %v706, %v702
    %v1171 = vpack.c.b16 %v711, %v707
    %v1172 = vpack.c.b16 %v712, %v708
    %v1173 = vpack.c.b16 %v713, %v709
    %v1174 = vpack.c.b16 %v714, %v710
    %v1175 = vpack.c.b16 %v719, %v715
    %v1176 = vpack.c.b16 %v720, %v716
    %v1177 = vpack.c.b16 %v721, %v717
    %v1178 = vpack.c.b16 %v722, %v718
    %v1179 = vpack.c.b16 %v727, %v723
    %v1180 = vpack.c.b16 %v728, %v724
    %v1181 = vpack.c.b16 %v729, %v725
    %v1182 = vpack.c.b16 %v730, %v726
    %v1183 = vpack.c.b16 %v735, %v731
    %v1184 = vpack.c.b16 %v736, %v732
    %v1185 = vpack.c.b16 %v737, %v733
    %v1186 = vpack.c.b16 %v738, %v734
    %v1187 = vpack.c.b16 %v743, %v739
    %v1188 = vpack.c.b16 %v744, %v740
    %v1189 = vpack.c.b16 %v745, %v741
    %v1190 = vpack.c.b16 %v746, %v742
    %v1191 = vpack.c.b16 %v751, %v747
    %v1192 = vpack.c.b16 %v752, %v748
    %v1193 = vpack.c.b16 %v753, %v749
    %v1194 = vpack.c.b16 %v754, %v750
    %v1195 = vpack.c.b16 %v759, %v755
    %v1196 = vpack.c.b16 %v760, %v756
    %v1197 = vpack.c.b16 %v761, %v757
    %v1198 = vpack.c.b16 %v762, %v758
    %v1199 = vpack.c.b16 %v767, %v763
    %v1200 = vpack.c.b16 %v768, %v764
    %v1201 = vpack.c.b16 %v769, %v765
    %v1202 = vpack.c.b16 %v770, %v766
    %v1203 = vpack.c.b16 %v775, %v771
    %v1204 = vpack.c.b16 %v776, %v772
    %v1205 = vpack.c.b16 %v777, %v773
    %v1206 = vpack.c.b16 %v778, %v774
    %v1207 = vpack.c.b16 %v783, %v779
    %v1208 = vpack.c.b16 %v784, %v780
    %v1209 = vpack.c.b16 %v785, %v781
    %v1210 = vpack.c.b16 %v786, %v782
    %v1211 = vpack.c.b16 %v791, %v787
    %v1212 = vpack.c.b16 %v792, %v788
    %v1213 = vpack.c.b16 %v793, %v789
    %v1214 = vpack.c.b16 %v794, %v790
    %v1215 = vpack.c.b16 %v799, %v795
    %v1216 = vpack.c.b16 %v800, %v796
    %v1217 = vpack.c.b16 %v801, %v797
    %v1218 = vpack.c.b16 %v802, %v798
    %v1219 = vpack.c.b16 %v807, %v803
    %v1220 = vpack.c.b16 %v808, %v804
    %v1221 = vpack.c.b16 %v809, %v805
    %v1222 = vpack.c.b16 %v810, %v806
    %v1223 = vpack.c.b16 %v815, %v811
    %v1224 = vpack.c.b16 %v816, %v812
    %v1225 = vpack.c.b16 %v817, %v813
    %v1226 = vpack.c.b16 %v818, %v814
    %v1227 = vpack.c.b16 %v823, %v819
    %v1228 = vpack.c.b16 %v824, %v820
    %v1229 = vpack.c.b16 %v825, %v821
    %v1230 = vpack.c.b16 %v826, %v822
    %v1231 = vpack.c.b16 %v831, %v827
    %v1232 = vpack.c.b16 %v832, %v828
    %v1233 = vpack.c.b16 %v833, %v829
    %v1234 = vpack.c.b16 %v834, %v830
    %v1235 = vpack.c.b16 %v839, %v835
    %v1236 = vpack.c.b16 %v840, %v836
    %v1237 = vpack.c.b16 %v841, %v837
    %v1238 = vpack.c.b16 %v842, %v838
    %v1239 = vpack.c.b16 %v847, %v843
    %v1240 = vpack.c.b16 %v848, %v844
    %v1241 = vpack.c.b16 %v849, %v845
    %v1242 = vpack.c.b16 %v850, %v846
    %v1243 = vpack.c.b16 %v855, %v851
    %v1244 = vpack.c.b16 %v856, %v852
    %v1245 = vpack.c.b16 %v857, %v853
    %v1246 = vpack.c.b16 %v858, %v854
    %v1247 = vpack.c.b16 %v863, %v859
    %v1248 = vpack.c.b16 %v864, %v860
    %v1249 = vpack.c.b16 %v865, %v861
    %v1250 = vpack.c.b16 %v866, %v862
    %v1251 = vpack.c.b16 %v871, %v867
    %v1252 = vpack.c.b16 %v872, %v868
    %v1253 = vpack.c.b16 %v873, %v869
    %v1254 = vpack.c.b16 %v874, %v870
    %v1255 = vpack.c.b16 %v879, %v875
    %v1256 = vpack.c.b16 %v880, %v876
    %v1257 = vpack.c.b16 %v881, %v877
    %v1258 = vpack.c.b16 %v882, %v878
    %v1259 = vpack.c.b16 %v887, %v883
    %v1260 = vpack.c.b16 %v888, %v884
    %v1261 = vpack.c.b16 %v889, %v885
    %v1262 = vpack.c.b16 %v890, %v886
    %v1263 = vpack.c.b16 %v895, %v891
    %v1264 = vpack.c.b16 %v896, %v892
    %v1265 = vpack.c.b16 %v897, %v893
    %v1266 = vpack.c.b16 %v898, %v894
    %v1267 = vpack.c.b16 %v903, %v899
    %v1268 = vpack.c.b16 %v904, %v900
    %v1269 = vpack.c.b16 %v905, %v901
    %v1270 = vpack.c.b16 %v906, %v902
    %v1271 = vpack.c.b16 %v911, %v907
    %v1272 = vpack.c.b16 %v912, %v908
    %v1273 = vpack.c.b16 %v913, %v909
    %v1274 = vpack.c.b16 %v914, %v910
    %v1275 = vpack.c.b16 %v919, %v915
    %v1276 = vpack.c.b16 %v920, %v916
    %v1277 = vpack.c.b16 %v921, %v917
    %v1278 = vpack.c.b16 %v922, %v918
    %v1279 = vpack.c.b16 %v927, %v923
    %v1280 = vpack.c.b16 %v928, %v924
    %v1281 = vpack.c.b16 %v929, %v925
    %v1282 = vpack.c.b16 %v930, %v926
    %v1283 = vpack.c.b16 %v935, %v931
    %v1284 = vpack.c.b16 %v936, %v932
    %v1285 = vpack.c.b16 %v937, %v933
    %v1286 = vpack.c.b16 %v938, %v934
    %v1287 = vpack.c.b16 %v943, %v939
    %v1288 = vpack.c.b16 %v944, %v940
    %v1289 = vpack.c.b16 %v945, %v941
    %v1290 = vpack.c.b16 %v946, %v942
    %v1291 = vpack.c.b16 %v951, %v947
    %v1292 = vpack.c.b16 %v952, %v948
    %v1293 = vpack.c.b16 %v953, %v949
    %v1294 = vpack.c.b16 %v954, %v950
    %v1295 = vpack.c.b16 %v959, %v955
    %v1296 = vpack.c.b16 %v960, %v956
    %v1297 = vpack.c.b16 %v961, %v957
    %v1298 = vpack.c.b16 %v962, %v958
    %v1299 = vpack.c.b16 %v967, %v963
    %v1300 = vpack.c.b16 %v968, %v964
    %v1301 = vpack.c.b16 %v969, %v965
    %v1302 = vpack.c.b16 %v970, %v966
    %v1303 = vpack.c.b16 %v975, %v971
    %v1304 = vpack.c.b16 %v976, %v972
    %v1305 = vpack.c.b16 %v977, %v973
    %v1306 = vpack.c.b16 %v978, %v974
    %v1307 = vpack.c.b16 %v983, %v979
    %v1308 = vpack.c.b16 %v984, %v980
    %v1309 = vpack.c.b16 %v985, %v981
    %v1310 = vpack.c.b16 %v986, %v982
    %v1311 = vpack.c.b16 %v991, %v987
    %v1312 = vpack.c.b16 %v992, %v988
    %v1313 = vpack.c.b16 %v993, %v989
    %v1314 = vpack.c.b16 %v994, %v990
    %v1315 = vpack.c.b16 %v999, %v995
    %v1316 = vpack.c.b16 %v1000, %v996
    %v1317 = vpack.c.b16 %v1001, %v997
    %v1318 = vpack.c.b16 %v1002, %v998
    %v1319 = vpack.c.b16 %v1007, %v1003
    %v1320 = vpack.c.b16 %v1008, %v1004
    %v1321 = vpack.c.b16 %v1009, %v1005
    %v1322 = vpack.c.b16 %v1010, %v1006
    %v1323 = vpack.c.b16 %v1015, %v1011
    %v1324 = vpack.c.b16 %v1016, %v1012
    %v1325 = vpack.c.b16 %v1017, %v1013
    %v1326 = vpack.c.b16 %v1018, %v1014
    %v1327 = vpack.c.b16 %v1023, %v1019
    %v1328 = vpack.c.b16 %v1024, %v1020
    %v1329 = vpack.c.b16 %v1025, %v1021
    %v1330 = vpack.c.b16 %v1026, %v1022
    %v1331 = vpack.c.b16 %v1031, %v1027
    %v1332 = vpack.c.b16 %v1032, %v1028
    %v1333 = vpack.c.b16 %v1033, %v1029
    %v1334 = vpack.c.b16 %v1034, %v1030
    %v1335 = vpack.c.b16 %v1039, %v1035
    %v1336 = vpack.c.b16 %v1040, %v1036
    %v1337 = vpack.c.b16 %v1041, %v1037
    %v1338 = vpack.c.b16 %v1042, %v1038
    %v1339 = vpack.c.b16 %v1047, %v1043
    %v1340 = vpack.c.b16 %v1048, %v1044
    %v1341 = vpack.c.b16 %v1049, %v1045
    %v1342 = vpack.c.b16 %v1050, %v1046
    %v1343 = vpack.c.b16 %v1055, %v1051
    %v1344 = vpack.c.b16 %v1056, %v1052
    %v1345 = vpack.c.b16 %v1057, %v1053
    %v1346 = vpack.c.b16 %v1058, %v1054
    %v1347 = vpack.c.b16 %v1063, %v1059
    %v1348 = vpack.c.b16 %v1064, %v1060
    %v1349 = vpack.c.b16 %v1065, %v1061
    %v1350 = vpack.c.b16 %v1066, %v1062
    %v1351 = vpack.c.b16 %v1071, %v1067
    %v1352 = vpack.c.b16 %v1072, %v1068
    %v1353 = vpack.c.b16 %v1073, %v1069
    %v1354 = vpack.c.b16 %v1074, %v1070
    %v1355 = vpack.c.b16 %v1079, %v1075
    %v1356 = vpack.c.b16 %v1080, %v1076
    %v1357 = vpack.c.b16 %v1081, %v1077
    %v1358 = vpack.c.b16 %v1082, %v1078
    %v1359 = vpack.c.b16 %v1087, %v1083
    %v1360 = vpack.c.b16 %v1088, %v1084
    %v1361 = vpack.c.b16 %v1089, %v1085
    %v1362 = vpack.c.b16 %v1090, %v1086
    %v1363 = vpack.c.b16 %v1095, %v1091
    %v1364 = vpack.c.b16 %v1096, %v1092
    %v1365 = vpack.c.b16 %v1097, %v1093
    %v1366 = vpack.c.b16 %v1098, %v1094
    %v1367 = vpack.c.b16 %v1103, %v1099
    %v1368 = vpack.c.b16 %v1104, %v1100
    %v1369 = vpack.c.b16 %v1105, %v1101
    %v1370 = vpack.c.b16 %v1106, %v1102
    %v1371 = vpack.c.b16 %v1111, %v1107
    %v1372 = vpack.c.b16 %v1112, %v1108
    %v1373 = vpack.c.b16 %v1113, %v1109
    %v1374 = vpack.c.b16 %v1114, %v1110
    %v1375 = vpack.c.b16 %v1119, %v1115
    %v1376 = vpack.c.b16 %v1120, %v1116
    %v1377 = vpack.c.b16 %v1121, %v1117
    %v1378 = vpack.c.b16 %v1122, %v1118
    %1635 = vmatpush.bf16.msra.mxu0 %v1151
    %1636 = vmatpush.bf16.msra.mxu0 %v1147
    %1637 = vmatpush.bf16.msra.mxu0 %v1143
    %1638 = vmatpush.bf16.msra.mxu0 %v1139
    %1639 = vmatpush.bf16.msra.mxu0 %v1135
    %1640 = vmatpush.bf16.msra.mxu0 %v1131
    %1641 = vmatpush.bf16.msra.mxu0 %v1127
    %1642 = vmatpush.bf16.msra.mxu0 %v1123
    %1643 = vmatmul.bf16.gmra.mxu0 %v339
    %v1644 = vpop.f32.mrf.mxu0
    %v1645 = vadd.f32 %v319, %v1644
    %v1646 = vpop.f32.mrf.mxu0
    %1647 = vdwg.mxu0
    %1648 = vmatpush.bf16.msra.mxu0 %v1183
    %1649 = vmatpush.bf16.msra.mxu0 %v1179
    %1650 = vmatpush.bf16.msra.mxu0 %v1175
    %1651 = vmatpush.bf16.msra.mxu0 %v1171
    %1652 = vmatpush.bf16.msra.mxu0 %v1167
    %1653 = vmatpush.bf16.msra.mxu0 %v1163
    %1654 = vmatpush.bf16.msra.mxu0 %v1159
    %1655 = vmatpush.bf16.msra.mxu0 %v1155
    %1656 = vmatmul.bf16.gmra.mxu0 %v340
    %v1657 = vpop.f32.mrf.mxu0
    %v1658 = vadd.f32 %v1645, %v1657
    %v1659 = vpop.f32.mrf.mxu0
    %1660 = vdwg.mxu0
    %1661 = vmatpush.bf16.msra.mxu0 %v1215
    %1662 = vmatpush.bf16.msra.mxu0 %v1211
    %1663 = vmatpush.bf16.msra.mxu0 %v1207
    %1664 = vmatpush.bf16.msra.mxu0 %v1203
    %1665 = vmatpush.bf16.msra.mxu0 %v1199
    %1666 = vmatpush.bf16.msra.mxu0 %v1195
    %1667 = vmatpush.bf16.msra.mxu0 %v1191
    %1668 = vmatpush.bf16.msra.mxu0 %v1187
    %1669 = vmatmul.bf16.gmra.mxu0 %v341
    %v1670 = vpop.f32.mrf.mxu0
    %v1671 = vadd.f32 %v1658, %v1670
    %v1672 = vpop.f32.mrf.mxu0
    %1673 = vdwg.mxu0
    %1674 = vmatpush.bf16.msra.mxu0 %v1247
    %1675 = vmatpush.bf16.msra.mxu0 %v1243
    %1676 = vmatpush.bf16.msra.mxu0 %v1239
    %1677 = vmatpush.bf16.msra.mxu0 %v1235
    %1678 = vmatpush.bf16.msra.mxu0 %v1231
    %1679 = vmatpush.bf16.msra.mxu0 %v1227
    %1680 = vmatpush.bf16.msra.mxu0 %v1223
    %1681 = vmatpush.bf16.msra.mxu0 %v1219
    %1682 = vmatmul.bf16.gmra.mxu0 %v342
    %v1683 = vpop.f32.mrf.mxu0
    %v1684 = vadd.f32 %v1671, %v1683
    %v1685 = vpop.f32.mrf.mxu0
    %1686 = vdwg.mxu0
    %1687 = vmatpush.bf16.msra.mxu0 %v1279
    %1688 = vmatpush.bf16.msra.mxu0 %v1275
    %1689 = vmatpush.bf16.msra.mxu0 %v1271
    %1690 = vmatpush.bf16.msra.mxu0 %v1267
    %1691 = vmatpush.bf16.msra.mxu0 %v1263
    %1692 = vmatpush.bf16.msra.mxu0 %v1259
    %1693 = vmatpush.bf16.msra.mxu0 %v1255
    %1694 = vmatpush.bf16.msra.mxu0 %v1251
    %1695 = vmatmul.bf16.gmra.mxu0 %v343
    %v1696 = vpop.f32.mrf.mxu0
    %v1697 = vadd.f32 %v1684, %v1696
    %v1698 = vpop.f32.mrf.mxu0
    %1699 = vdwg.mxu0
    %1700 = vmatpush.bf16.msra.mxu0 %v1311
    %1701 = vmatpush.bf16.msra.mxu0 %v1307
    %1702 = vmatpush.bf16.msra.mxu0 %v1303
    %1703 = vmatpush.bf16.msra.mxu0 %v1299
    %1704 = vmatpush.bf16.msra.mxu0 %v1295
    %1705 = vmatpush.bf16.msra.mxu0 %v1291
    %1706 = vmatpush.bf16.msra.mxu0 %v1287
    %1707 = vmatpush.bf16.msra.mxu0 %v1283
    %1708 = vmatmul.bf16.gmra.mxu0 %v344
    %v1709 = vpop.f32.mrf.mxu0
    %v1710 = vadd.f32 %v1697, %v1709
    %v1711 = vpop.f32.mrf.mxu0
    %1712 = vdwg.mxu0
    %1713 = vmatpush.bf16.msra.mxu0 %v1343
    %1714 = vmatpush.bf16.msra.mxu0 %v1339
    %1715 = vmatpush.bf16.msra.mxu0 %v1335
    %1716 = vmatpush.bf16.msra.mxu0 %v1331
    %1717 = vmatpush.bf16.msra.mxu0 %v1327
    %1718 = vmatpush.bf16.msra.mxu0 %v1323
    %1719 = vmatpush.bf16.msra.mxu0 %v1319
    %1720 = vmatpush.bf16.msra.mxu0 %v1315
    %1721 = vmatmul.bf16.gmra.mxu0 %v345
    %v1722 = vpop.f32.mrf.mxu0
    %v1723 = vadd.f32 %v1710, %v1722
    %v1724 = vpop.f32.mrf.mxu0
    %1725 = vdwg.mxu0
    %1726 = vmatpush.bf16.msra.mxu0 %v1375
    %1727 = vmatpush.bf16.msra.mxu0 %v1371
    %1728 = vmatpush.bf16.msra.mxu0 %v1367
    %1729 = vmatpush.bf16.msra.mxu0 %v1363
    %1730 = vmatpush.bf16.msra.mxu0 %v1359
    %1731 = vmatpush.bf16.msra.mxu0 %v1355
    %1732 = vmatpush.bf16.msra.mxu0 %v1351
    %1733 = vmatpush.bf16.msra.mxu0 %v1347
    %1734 = vmatmul.bf16.gmra.mxu0 %v346
    %v1735 = vpop.f32.mrf.mxu0
    %v1736 = vadd.f32 %v1723, %v1735
    %v1737 = vpop.f32.mrf.mxu0
    %1738 = vdwg.mxu0
    %1739 = vmatpush.bf16.msra.mxu0 %v1152
    %1740 = vmatpush.bf16.msra.mxu0 %v1148
    %1741 = vmatpush.bf16.msra.mxu0 %v1144
    %1742 = vmatpush.bf16.msra.mxu0 %v1140
    %1743 = vmatpush.bf16.msra.mxu0 %v1136
    %1744 = vmatpush.bf16.msra.mxu0 %v1132
    %1745 = vmatpush.bf16.msra.mxu0 %v1128
    %1746 = vmatpush.bf16.msra.mxu0 %v1124
    %1747 = vmatmul.bf16.gmra.mxu0 %v339
    %v1748 = vpop.f32.mrf.mxu0
    %v1749 = vadd.f32 %v320, %v1748
    %v1750 = vpop.f32.mrf.mxu0
    %1751 = vdwg.mxu0
    %1752 = vmatpush.bf16.msra.mxu0 %v1184
    %1753 = vmatpush.bf16.msra.mxu0 %v1180
    %1754 = vmatpush.bf16.msra.mxu0 %v1176
    %1755 = vmatpush.bf16.msra.mxu0 %v1172
    %1756 = vmatpush.bf16.msra.mxu0 %v1168
    %1757 = vmatpush.bf16.msra.mxu0 %v1164
    %1758 = vmatpush.bf16.msra.mxu0 %v1160
    %1759 = vmatpush.bf16.msra.mxu0 %v1156
    %1760 = vmatmul.bf16.gmra.mxu0 %v340
    %v1761 = vpop.f32.mrf.mxu0
    %v1762 = vadd.f32 %v1749, %v1761
    %v1763 = vpop.f32.mrf.mxu0
    %1764 = vdwg.mxu0
    %1765 = vmatpush.bf16.msra.mxu0 %v1216
    %1766 = vmatpush.bf16.msra.mxu0 %v1212
    %1767 = vmatpush.bf16.msra.mxu0 %v1208
    %1768 = vmatpush.bf16.msra.mxu0 %v1204
    %1769 = vmatpush.bf16.msra.mxu0 %v1200
    %1770 = vmatpush.bf16.msra.mxu0 %v1196
    %1771 = vmatpush.bf16.msra.mxu0 %v1192
    %1772 = vmatpush.bf16.msra.mxu0 %v1188
    %1773 = vmatmul.bf16.gmra.mxu0 %v341
    %v1774 = vpop.f32.mrf.mxu0
    %v1775 = vadd.f32 %v1762, %v1774
    %v1776 = vpop.f32.mrf.mxu0
    %1777 = vdwg.mxu0
    %1778 = vmatpush.bf16.msra.mxu0 %v1248
    %1779 = vmatpush.bf16.msra.mxu0 %v1244
    %1780 = vmatpush.bf16.msra.mxu0 %v1240
    %1781 = vmatpush.bf16.msra.mxu0 %v1236
    %1782 = vmatpush.bf16.msra.mxu0 %v1232
    %1783 = vmatpush.bf16.msra.mxu0 %v1228
    %1784 = vmatpush.bf16.msra.mxu0 %v1224
    %1785 = vmatpush.bf16.msra.mxu0 %v1220
    %1786 = vmatmul.bf16.gmra.mxu0 %v342
    %v1787 = vpop.f32.mrf.mxu0
    %v1788 = vadd.f32 %v1775, %v1787
    %v1789 = vpop.f32.mrf.mxu0
    %1790 = vdwg.mxu0
    %1791 = vmatpush.bf16.msra.mxu0 %v1280
    %1792 = vmatpush.bf16.msra.mxu0 %v1276
    %1793 = vmatpush.bf16.msra.mxu0 %v1272
    %1794 = vmatpush.bf16.msra.mxu0 %v1268
    %1795 = vmatpush.bf16.msra.mxu0 %v1264
    %1796 = vmatpush.bf16.msra.mxu0 %v1260
    %1797 = vmatpush.bf16.msra.mxu0 %v1256
    %1798 = vmatpush.bf16.msra.mxu0 %v1252
    %1799 = vmatmul.bf16.gmra.mxu0 %v343
    %v1800 = vpop.f32.mrf.mxu0
    %v1801 = vadd.f32 %v1788, %v1800
    %v1802 = vpop.f32.mrf.mxu0
    %1803 = vdwg.mxu0
    %1804 = vmatpush.bf16.msra.mxu0 %v1312
    %1805 = vmatpush.bf16.msra.mxu0 %v1308
    %1806 = vmatpush.bf16.msra.mxu0 %v1304
    %1807 = vmatpush.bf16.msra.mxu0 %v1300
    %1808 = vmatpush.bf16.msra.mxu0 %v1296
    %1809 = vmatpush.bf16.msra.mxu0 %v1292
    %1810 = vmatpush.bf16.msra.mxu0 %v1288
    %1811 = vmatpush.bf16.msra.mxu0 %v1284
    %1812 = vmatmul.bf16.gmra.mxu0 %v344
    %v1813 = vpop.f32.mrf.mxu0
    %v1814 = vadd.f32 %v1801, %v1813
    %v1815 = vpop.f32.mrf.mxu0
    %1816 = vdwg.mxu0
    %1817 = vmatpush.bf16.msra.mxu0 %v1344
    %1818 = vmatpush.bf16.msra.mxu0 %v1340
    %1819 = vmatpush.bf16.msra.mxu0 %v1336
    %1820 = vmatpush.bf16.msra.mxu0 %v1332
    %1821 = vmatpush.bf16.msra.mxu0 %v1328
    %1822 = vmatpush.bf16.msra.mxu0 %v1324
    %1823 = vmatpush.bf16.msra.mxu0 %v1320
    %1824 = vmatpush.bf16.msra.mxu0 %v1316
    %1825 = vmatmul.bf16.gmra.mxu0 %v345
    %v1826 = vpop.f32.mrf.mxu0
    %v1827 = vadd.f32 %v1814, %v1826
    %v1828 = vpop.f32.mrf.mxu0
    %1829 = vdwg.mxu0
    %1830 = vmatpush.bf16.msra.mxu0 %v1376
    %1831 = vmatpush.bf16.msra.mxu0 %v1372
    %1832 = vmatpush.bf16.msra.mxu0 %v1368
    %1833 = vmatpush.bf16.msra.mxu0 %v1364
    %1834 = vmatpush.bf16.msra.mxu0 %v1360
    %1835 = vmatpush.bf16.msra.mxu0 %v1356
    %1836 = vmatpush.bf16.msra.mxu0 %v1352
    %1837 = vmatpush.bf16.msra.mxu0 %v1348
    %1838 = vmatmul.bf16.gmra.mxu0 %v346
    %v1839 = vpop.f32.mrf.mxu0
    %v1840 = vadd.f32 %v1827, %v1839
    %v1841 = vpop.f32.mrf.mxu0
    %1842 = vdwg.mxu0
    %1843 = vmatpush.bf16.msra.mxu0 %v1153
    %1844 = vmatpush.bf16.msra.mxu0 %v1149
    %1845 = vmatpush.bf16.msra.mxu0 %v1145
    %1846 = vmatpush.bf16.msra.mxu0 %v1141
    %1847 = vmatpush.bf16.msra.mxu0 %v1137
    %1848 = vmatpush.bf16.msra.mxu0 %v1133
    %1849 = vmatpush.bf16.msra.mxu0 %v1129
    %1850 = vmatpush.bf16.msra.mxu0 %v1125
    %1851 = vmatmul.bf16.gmra.mxu0 %v339
    %v1852 = vpop.f32.mrf.mxu0
    %v1853 = vadd.f32 %v321, %v1852
    %v1854 = vpop.f32.mrf.mxu0
    %1855 = vdwg.mxu0
    %1856 = vmatpush.bf16.msra.mxu0 %v1185
    %1857 = vmatpush.bf16.msra.mxu0 %v1181
    %1858 = vmatpush.bf16.msra.mxu0 %v1177
    %1859 = vmatpush.bf16.msra.mxu0 %v1173
    %1860 = vmatpush.bf16.msra.mxu0 %v1169
    %1861 = vmatpush.bf16.msra.mxu0 %v1165
    %1862 = vmatpush.bf16.msra.mxu0 %v1161
    %1863 = vmatpush.bf16.msra.mxu0 %v1157
    %1864 = vmatmul.bf16.gmra.mxu0 %v340
    %v1865 = vpop.f32.mrf.mxu0
    %v1866 = vadd.f32 %v1853, %v1865
    %v1867 = vpop.f32.mrf.mxu0
    %1868 = vdwg.mxu0
    %1869 = vmatpush.bf16.msra.mxu0 %v1217
    %1870 = vmatpush.bf16.msra.mxu0 %v1213
    %1871 = vmatpush.bf16.msra.mxu0 %v1209
    %1872 = vmatpush.bf16.msra.mxu0 %v1205
    %1873 = vmatpush.bf16.msra.mxu0 %v1201
    %1874 = vmatpush.bf16.msra.mxu0 %v1197
    %1875 = vmatpush.bf16.msra.mxu0 %v1193
    %1876 = vmatpush.bf16.msra.mxu0 %v1189
    %1877 = vmatmul.bf16.gmra.mxu0 %v341
    %v1878 = vpop.f32.mrf.mxu0
    %v1879 = vadd.f32 %v1866, %v1878
    %v1880 = vpop.f32.mrf.mxu0
    %1881 = vdwg.mxu0
    %1882 = vmatpush.bf16.msra.mxu0 %v1249
    %1883 = vmatpush.bf16.msra.mxu0 %v1245
    %1884 = vmatpush.bf16.msra.mxu0 %v1241
    %1885 = vmatpush.bf16.msra.mxu0 %v1237
    %1886 = vmatpush.bf16.msra.mxu0 %v1233
    %1887 = vmatpush.bf16.msra.mxu0 %v1229
    %1888 = vmatpush.bf16.msra.mxu0 %v1225
    %1889 = vmatpush.bf16.msra.mxu0 %v1221
    %1890 = vmatmul.bf16.gmra.mxu0 %v342
    %v1891 = vpop.f32.mrf.mxu0
    %v1892 = vadd.f32 %v1879, %v1891
    %v1893 = vpop.f32.mrf.mxu0
    %1894 = vdwg.mxu0
    %1895 = vmatpush.bf16.msra.mxu0 %v1281
    %1896 = vmatpush.bf16.msra.mxu0 %v1277
    %1897 = vmatpush.bf16.msra.mxu0 %v1273
    %1898 = vmatpush.bf16.msra.mxu0 %v1269
    %1899 = vmatpush.bf16.msra.mxu0 %v1265
    %1900 = vmatpush.bf16.msra.mxu0 %v1261
    %1901 = vmatpush.bf16.msra.mxu0 %v1257
    %1902 = vmatpush.bf16.msra.mxu0 %v1253
    %1903 = vmatmul.bf16.gmra.mxu0 %v343
    %v1904 = vpop.f32.mrf.mxu0
    %v1905 = vadd.f32 %v1892, %v1904
    %v1906 = vpop.f32.mrf.mxu0
    %1907 = vdwg.mxu0
    %1908 = vmatpush.bf16.msra.mxu0 %v1313
    %1909 = vmatpush.bf16.msra.mxu0 %v1309
    %1910 = vmatpush.bf16.msra.mxu0 %v1305
    %1911 = vmatpush.bf16.msra.mxu0 %v1301
    %1912 = vmatpush.bf16.msra.mxu0 %v1297
    %1913 = vmatpush.bf16.msra.mxu0 %v1293
    %1914 = vmatpush.bf16.msra.mxu0 %v1289
    %1915 = vmatpush.bf16.msra.mxu0 %v1285
    %1916 = vmatmul.bf16.gmra.mxu0 %v344
    %v1917 = vpop.f32.mrf.mxu0
    %v1918 = vadd.f32 %v1905, %v1917
    %v1919 = vpop.f32.mrf.mxu0
    %1920 = vdwg.mxu0
    %1921 = vmatpush.bf16.msra.mxu0 %v1345
    %1922 = vmatpush.bf16.msra.mxu0 %v1341
    %1923 = vmatpush.bf16.msra.mxu0 %v1337
    %1924 = vmatpush.bf16.msra.mxu0 %v1333
    %1925 = vmatpush.bf16.msra.mxu0 %v1329
    %1926 = vmatpush.bf16.msra.mxu0 %v1325
    %1927 = vmatpush.bf16.msra.mxu0 %v1321
    %1928 = vmatpush.bf16.msra.mxu0 %v1317
    %1929 = vmatmul.bf16.gmra.mxu0 %v345
    %v1930 = vpop.f32.mrf.mxu0
    %v1931 = vadd.f32 %v1918, %v1930
    %v1932 = vpop.f32.mrf.mxu0
    %1933 = vdwg.mxu0
    %1934 = vmatpush.bf16.msra.mxu0 %v1377
    %1935 = vmatpush.bf16.msra.mxu0 %v1373
    %1936 = vmatpush.bf16.msra.mxu0 %v1369
    %1937 = vmatpush.bf16.msra.mxu0 %v1365
    %1938 = vmatpush.bf16.msra.mxu0 %v1361
    %1939 = vmatpush.bf16.msra.mxu0 %v1357
    %1940 = vmatpush.bf16.msra.mxu0 %v1353
    %1941 = vmatpush.bf16.msra.mxu0 %v1349
    %1942 = vmatmul.bf16.gmra.mxu0 %v346
    %v1943 = vpop.f32.mrf.mxu0
    %v1944 = vadd.f32 %v1931, %v1943
    %v1945 = vpop.f32.mrf.mxu0
    %1946 = vdwg.mxu0
    %1947 = vmatpush.bf16.msra.mxu0 %v1154
    %1948 = vmatpush.bf16.msra.mxu0 %v1150
    %1949 = vmatpush.bf16.msra.mxu0 %v1146
    %1950 = vmatpush.bf16.msra.mxu0 %v1142
    %1951 = vmatpush.bf16.msra.mxu0 %v1138
    %1952 = vmatpush.bf16.msra.mxu0 %v1134
    %1953 = vmatpush.bf16.msra.mxu0 %v1130
    %1954 = vmatpush.bf16.msra.mxu0 %v1126
    %1955 = vmatmul.bf16.gmra.mxu0 %v339
    %v1956 = vpop.f32.mrf.mxu0
    %v1957 = vadd.f32 %v322, %v1956
    %v1958 = vpop.f32.mrf.mxu0
    %1959 = vdwg.mxu0
    %1960 = vmatpush.bf16.msra.mxu0 %v1186
    %1961 = vmatpush.bf16.msra.mxu0 %v1182
    %1962 = vmatpush.bf16.msra.mxu0 %v1178
    %1963 = vmatpush.bf16.msra.mxu0 %v1174
    %1964 = vmatpush.bf16.msra.mxu0 %v1170
    %1965 = vmatpush.bf16.msra.mxu0 %v1166
    %1966 = vmatpush.bf16.msra.mxu0 %v1162
    %1967 = vmatpush.bf16.msra.mxu0 %v1158
    %1968 = vmatmul.bf16.gmra.mxu0 %v340
    %v1969 = vpop.f32.mrf.mxu0
    %v1970 = vadd.f32 %v1957, %v1969
    %v1971 = vpop.f32.mrf.mxu0
    %1972 = vdwg.mxu0
    %1973 = vmatpush.bf16.msra.mxu0 %v1218
    %1974 = vmatpush.bf16.msra.mxu0 %v1214
    %1975 = vmatpush.bf16.msra.mxu0 %v1210
    %1976 = vmatpush.bf16.msra.mxu0 %v1206
    %1977 = vmatpush.bf16.msra.mxu0 %v1202
    %1978 = vmatpush.bf16.msra.mxu0 %v1198
    %1979 = vmatpush.bf16.msra.mxu0 %v1194
    %1980 = vmatpush.bf16.msra.mxu0 %v1190
    %1981 = vmatmul.bf16.gmra.mxu0 %v341
    %v1982 = vpop.f32.mrf.mxu0
    %v1983 = vadd.f32 %v1970, %v1982
    %v1984 = vpop.f32.mrf.mxu0
    %1985 = vdwg.mxu0
    %1986 = vmatpush.bf16.msra.mxu0 %v1250
    %1987 = vmatpush.bf16.msra.mxu0 %v1246
    %1988 = vmatpush.bf16.msra.mxu0 %v1242
    %1989 = vmatpush.bf16.msra.mxu0 %v1238
    %1990 = vmatpush.bf16.msra.mxu0 %v1234
    %1991 = vmatpush.bf16.msra.mxu0 %v1230
    %1992 = vmatpush.bf16.msra.mxu0 %v1226
    %1993 = vmatpush.bf16.msra.mxu0 %v1222
    %1994 = vmatmul.bf16.gmra.mxu0 %v342
    %v1995 = vpop.f32.mrf.mxu0
    %v1996 = vadd.f32 %v1983, %v1995
    %v1997 = vpop.f32.mrf.mxu0
    %1998 = vdwg.mxu0
    %1999 = vmatpush.bf16.msra.mxu0 %v1282
    %2000 = vmatpush.bf16.msra.mxu0 %v1278
    %2001 = vmatpush.bf16.msra.mxu0 %v1274
    %2002 = vmatpush.bf16.msra.mxu0 %v1270
    %2003 = vmatpush.bf16.msra.mxu0 %v1266
    %2004 = vmatpush.bf16.msra.mxu0 %v1262
    %2005 = vmatpush.bf16.msra.mxu0 %v1258
    %2006 = vmatpush.bf16.msra.mxu0 %v1254
    %2007 = vmatmul.bf16.gmra.mxu0 %v343
    %v2008 = vpop.f32.mrf.mxu0
    %v2009 = vadd.f32 %v1996, %v2008
    %v2010 = vpop.f32.mrf.mxu0
    %2011 = vdwg.mxu0
    %2012 = vmatpush.bf16.msra.mxu0 %v1314
    %2013 = vmatpush.bf16.msra.mxu0 %v1310
    %2014 = vmatpush.bf16.msra.mxu0 %v1306
    %2015 = vmatpush.bf16.msra.mxu0 %v1302
    %2016 = vmatpush.bf16.msra.mxu0 %v1298
    %2017 = vmatpush.bf16.msra.mxu0 %v1294
    %2018 = vmatpush.bf16.msra.mxu0 %v1290
    %2019 = vmatpush.bf16.msra.mxu0 %v1286
    %2020 = vmatmul.bf16.gmra.mxu0 %v344
    %v2021 = vpop.f32.mrf.mxu0
    %v2022 = vadd.f32 %v2009, %v2021
    %v2023 = vpop.f32.mrf.mxu0
    %2024 = vdwg.mxu0
    %2025 = vmatpush.bf16.msra.mxu0 %v1346
    %2026 = vmatpush.bf16.msra.mxu0 %v1342
    %2027 = vmatpush.bf16.msra.mxu0 %v1338
    %2028 = vmatpush.bf16.msra.mxu0 %v1334
    %2029 = vmatpush.bf16.msra.mxu0 %v1330
    %2030 = vmatpush.bf16.msra.mxu0 %v1326
    %2031 = vmatpush.bf16.msra.mxu0 %v1322
    %2032 = vmatpush.bf16.msra.mxu0 %v1318
    %2033 = vmatmul.bf16.gmra.mxu0 %v345
    %v2034 = vpop.f32.mrf.mxu0
    %v2035 = vadd.f32 %v2022, %v2034
    %v2036 = vpop.f32.mrf.mxu0
    %2037 = vdwg.mxu0
    %2038 = vmatpush.bf16.msra.mxu0 %v1378
    %2039 = vmatpush.bf16.msra.mxu0 %v1374
    %2040 = vmatpush.bf16.msra.mxu0 %v1370
    %2041 = vmatpush.bf16.msra.mxu0 %v1366
    %2042 = vmatpush.bf16.msra.mxu0 %v1362
    %2043 = vmatpush.bf16.msra.mxu0 %v1358
    %2044 = vmatpush.bf16.msra.mxu0 %v1354
    %2045 = vmatpush.bf16.msra.mxu0 %v1350
    %2046 = vmatmul.bf16.gmra.mxu0 %v346
    %v2047 = vpop.f32.mrf.mxu0
    %v2048 = vadd.f32 %v2035, %v2047
    %v2049 = vpop.f32.mrf.mxu0
    %2050 = vdwg.mxu0
    %v2051 = vmax.f32 %v1736, 0.0
    %v2052 = vmax.f32 %v1840, 0.0
    %v2053 = vmax.f32 %v1944, 0.0
    %v2054 = vmax.f32 %v2048, 0.0
    %v2055 = vrot.slane %v2051, 4
    %v2056 = vadd.f32 %v2051, %v2055
    %v2057 = vrot.slane %v2056, 2
    %v2058 = vadd.f32 %v2056, %v2057
    %v2059 = vrot.slane %v2058, 1
    %v2060 = vadd.f32 %v2058, %v2059
    %v2061 = vrot.slane %v2052, 4
    %v2062 = vadd.f32 %v2052, %v2061
    %v2063 = vrot.slane %v2062, 2
    %v2064 = vadd.f32 %v2062, %v2063
    %v2065 = vrot.slane %v2064, 1
    %v2066 = vadd.f32 %v2064, %v2065
    %v2067 = vrot.slane %v2053, 4
    %v2068 = vadd.f32 %v2053, %v2067
    %v2069 = vrot.slane %v2068, 2
    %v2070 = vadd.f32 %v2068, %v2069
    %v2071 = vrot.slane %v2070, 1
    %v2072 = vadd.f32 %v2070, %v2071
    %v2073 = vrot.slane %v2054, 4
    %v2074 = vadd.f32 %v2054, %v2073
    %v2075 = vrot.slane %v2074, 2
    %v2076 = vadd.f32 %v2074, %v2075
    %v2077 = vrot.slane %v2076, 1
    %v2078 = vadd.f32 %v2076, %v2077
    %v2079 = vrcp.pop 8.0
    %v2080 = vmul.f32 8.0, %v2079
    %v2081 = vsub.f32 1.0, %v2080
    %v2082 = vmul.f32 %v2079, %v2081
    %v2083 = vadd.f32 %v2079, %v2082
    %vm2084 = vweird.f32 %v2079
    %v2085 = vsel %vm2084, %v2079, %v2083
    %v2086 = vmul.f32 %v2060, %v2085
    %v2087 = vmul.f32 %v2066, %v2085
    %v2088 = vmul.f32 %v2072, %v2085
    %v2089 = vmul.f32 %v2078, %v2085
    %v2090 = vmul.f32 %v2051, %v2051
    %v2091 = vmul.f32 %v2052, %v2052
    %v2092 = vmul.f32 %v2053, %v2053
    %v2093 = vmul.f32 %v2054, %v2054
    %v2094 = vrot.slane %v2090, 4
    %v2095 = vadd.f32 %v2090, %v2094
    %v2096 = vrot.slane %v2095, 2
    %v2097 = vadd.f32 %v2095, %v2096
    %v2098 = vrot.slane %v2097, 1
    %v2099 = vadd.f32 %v2097, %v2098
    %v2100 = vrot.slane %v2091, 4
    %v2101 = vadd.f32 %v2091, %v2100
    %v2102 = vrot.slane %v2101, 2
    %v2103 = vadd.f32 %v2101, %v2102
    %v2104 = vrot.slane %v2103, 1
    %v2105 = vadd.f32 %v2103, %v2104
    %v2106 = vrot.slane %v2092, 4
    %v2107 = vadd.f32 %v2092, %v2106
    %v2108 = vrot.slane %v2107, 2
    %v2109 = vadd.f32 %v2107, %v2108
    %v2110 = vrot.slane %v2109, 1
    %v2111 = vadd.f32 %v2109, %v2110
    %v2112 = vrot.slane %v2093, 4
    %v2113 = vadd.f32 %v2093, %v2112
    %v2114 = vrot.slane %v2113, 2
    %v2115 = vadd.f32 %v2113, %v2114
    %v2116 = vrot.slane %v2115, 1
    %v2117 = vadd.f32 %v2115, %v2116
    %v2118 = vmul.f32 %v2099, %v2085
    %v2119 = vmul.f32 %v2105, %v2085
    %v2120 = vmul.f32 %v2111, %v2085
    %v2121 = vmul.f32 %v2117, %v2085
    %v2122 = vmul.f32 %v2086, %v2086
    %v2123 = vmul.f32 %v2087, %v2087
    %v2124 = vmul.f32 %v2088, %v2088
    %v2125 = vmul.f32 %v2089, %v2089
    %v2126 = vsub.f32 %v2118, %v2122
    %v2127 = vsub.f32 %v2119, %v2123
    %v2128 = vsub.f32 %v2120, %v2124
    %v2129 = vsub.f32 %v2121, %v2125
    %v2130 = vsub.f32 %v2051, %v2086
    %v2131 = vsub.f32 %v2052, %v2087
    %v2132 = vsub.f32 %v2053, %v2088
    %v2133 = vsub.f32 %v2054, %v2089
    %v2134 = vadd.f32 %v2126, 1e-05
    %v2135 = vadd.f32 %v2127, 1e-05
    %v2136 = vadd.f32 %v2128, 1e-05
    %v2137 = vadd.f32 %v2129, 1e-05
    %v2138 = vrsqrt.pop %v2134
    %v2139 = vmul.f32 %v2138, %v2134
    %v2140 = vmul.f32 %v2139, %v2138
    %v2141 = vmul.f32 0.5, %v2140
    %v2142 = vsub.f32 1.5, %v2141
    %v2143 = vmul.f32 %v2138, %v2142
    %vm2144 = vweird.f32 %v2134
    %vm2145 = vweird.f32 %v2138
    %vm2146 = vmor %vm2144, %vm2145
    %v2147 = vsel %vm2146, %v2138, %v2143
    %v2148 = vrsqrt.pop %v2135
    %v2149 = vmul.f32 %v2148, %v2135
    %v2150 = vmul.f32 %v2149, %v2148
    %v2151 = vmul.f32 0.5, %v2150
    %v2152 = vsub.f32 1.5, %v2151
    %v2153 = vmul.f32 %v2148, %v2152
    %vm2154 = vweird.f32 %v2135
    %vm2155 = vweird.f32 %v2148
    %vm2156 = vmor %vm2154, %vm2155
    %v2157 = vsel %vm2156, %v2148, %v2153
    %v2158 = vrsqrt.pop %v2136
    %v2159 = vmul.f32 %v2158, %v2136
    %v2160 = vmul.f32 %v2159, %v2158
    %v2161 = vmul.f32 0.5, %v2160
    %v2162 = vsub.f32 1.5, %v2161
    %v2163 = vmul.f32 %v2158, %v2162
    %vm2164 = vweird.f32 %v2136
    %vm2165 = vweird.f32 %v2158
    %vm2166 = vmor %vm2164, %vm2165
    %v2167 = vsel %vm2166, %v2158, %v2163
    %v2168 = vrsqrt.pop %v2137
    %v2169 = vmul.f32 %v2168, %v2137
    %v2170 = vmul.f32 %v2169, %v2168
    %v2171 = vmul.f32 0.5, %v2170
    %v2172 = vsub.f32 1.5, %v2171
    %v2173 = vmul.f32 %v2168, %v2172
    %vm2174 = vweird.f32 %v2137
    %vm2175 = vweird.f32 %v2168
    %vm2176 = vmor %vm2174, %vm2175
    %v2177 = vsel %vm2176, %v2168, %v2173
    %v2178 = vmul.f32 %v2130, %v2147
    %v2179 = vmul.f32 %v2131, %v2157
    %v2180 = vmul.f32 %v2132, %v2167
    %v2181 = vmul.f32 %v2133, %v2177
    %v2183 = vperm.slane %v60, 0
    %v2184 = vperm.slane %v60, 1
    %v2185 = vperm.slane %v60, 2
    %v2186 = vperm.slane %v60, 3
    %v2191 = vmul.f32 %v2178, %v2183
    %v2192 = vmul.f32 %v2179, %v2184
    %v2193 = vmul.f32 %v2180, %v2185
    %v2194 = vmul.f32 %v2181, %v2186
    %v2196 = vperm.slane %v61, 0
    %v2197 = vperm.slane %v61, 1
    %v2198 = vperm.slane %v61, 2
    %v2199 = vperm.slane %v61, 3
    %v2204 = vadd.f32 %v2191, %v2196
    %v2205 = vadd.f32 %v2192, %v2197
    %v2206 = vadd.f32 %v2193, %v2198
    %v2207 = vadd.f32 %v2194, %v2199
    %v2208 = vld [vmem:[%s5 + $0xc] sm:$0x3]
    %v2209 = vld [vmem:[%s5 + $0xe] sm:$0x3]
    %v2210 = vld [vmem:[%s5 + $0x10] sm:$0x3]
    %v2211 = vpack.c.bf16 %v2204, %v2204
    %v2212 = vpack.c.bf16 %v2205, %v2205
    %v2213 = vpack.c.bf16 %v2206, %v2206
    %v2214 = vpack.c.bf16 %v2207, %v2207
    %v2215 = vld [vmem:[#allocation4] sm:$0xff]
    %v2216 = vld [vmem:[#allocation4 + $0x8] sm:$0xff]
    %v2217 = vld [vmem:[#allocation4 + $0x10] sm:$0xff]
    %v2218 = vld [vmem:[#allocation4 + $0x18] sm:$0xff]
    %v2219 = vld [vmem:[#allocation4 + $0x20] sm:$0xff]
    %v2220 = vld [vmem:[#allocation4 + $0x28] sm:$0xff]
    %v2221 = vld [vmem:[#allocation4 + $0x30] sm:$0xff]
    %v2222 = vld [vmem:[#allocation4 + $0x38] sm:$0xff]
    %v2223 = vld [vmem:[#allocation4 + $0x40] sm:$0xff]
    %v2224 = vld [vmem:[#allocation4 + $0x48] sm:$0xff]
    %v2225 = vld [vmem:[#allocation4 + $0x50] sm:$0xff]
    %v2226 = vld [vmem:[#allocation4 + $0x58] sm:$0xff]
    %v2227 = vld [vmem:[#allocation4 + $0x60] sm:$0xff]
    %v2228 = vld [vmem:[#allocation4 + $0x68] sm:$0xff]
    %v2229 = vld [vmem:[#allocation4 + $0x70] sm:$0xff]
    %v2230 = vld [vmem:[#allocation4 + $0x78] sm:$0xff]
    %v2231 = vld [vmem:[#allocation4 + $0x80] sm:$0xff]
    %v2232 = vld [vmem:[#allocation4 + $0x88] sm:$0xff]
    %v2233 = vld [vmem:[#allocation4 + $0x90] sm:$0xff]
    %v2234 = vld [vmem:[#allocation4 + $0x98] sm:$0xff]
    %v2235 = vld [vmem:[#allocation4 + $0xa0] sm:$0xff]
    %v2236 = vld [vmem:[#allocation4 + $0xa8] sm:$0xff]
    %v2237 = vld [vmem:[#allocation4 + $0xb0] sm:$0xff]
    %v2238 = vld [vmem:[#allocation4 + $0xb8] sm:$0xff]
    %v2239 = vld [vmem:[#allocation4 + $0xc0] sm:$0xff]
    %v2240 = vld [vmem:[#allocation4 + $0xc8] sm:$0xff]
    %v2241 = vld [vmem:[#allocation4 + $0xd0] sm:$0xff]
    %v2242 = vld [vmem:[#allocation4 + $0xd8] sm:$0xff]
    %v2243 = vld [vmem:[#allocation4 + $0xe0] sm:$0xff]
    %v2244 = vld [vmem:[#allocation4 + $0xe8] sm:$0xff]
    %v2245 = vld [vmem:[#allocation4 + $0xf0] sm:$0xff]
    %v2246 = vld [vmem:[#allocation4 + $0xf8] sm:$0xff]
    %v2247 = vld [vmem:[#allocation4 + $0x100] sm:$0xff]
    %v2248 = vld [vmem:[#allocation4 + $0x108] sm:$0xff]
    %v2249 = vld [vmem:[#allocation4 + $0x110] sm:$0xff]
    %v2250 = vld [vmem:[#allocation4 + $0x118] sm:$0xff]
    %v2251 = vld [vmem:[#allocation4 + $0x120] sm:$0xff]
    %v2252 = vld [vmem:[#allocation4 + $0x128] sm:$0xff]
    %v2253 = vld [vmem:[#allocation4 + $0x130] sm:$0xff]
    %v2254 = vld [vmem:[#allocation4 + $0x138] sm:$0xff]
    %v2255 = vld [vmem:[#allocation4 + $0x140] sm:$0xff]
    %v2256 = vld [vmem:[#allocation4 + $0x148] sm:$0xff]
    %v2257 = vld [vmem:[#allocation4 + $0x150] sm:$0xff]
    %v2258 = vld [vmem:[#allocation4 + $0x158] sm:$0xff]
    %v2259 = vld [vmem:[#allocation4 + $0x160] sm:$0xff]
    %v2260 = vld [vmem:[#allocation4 + $0x168] sm:$0xff]
    %v2261 = vld [vmem:[#allocation4 + $0x170] sm:$0xff]
    %v2262 = vld [vmem:[#allocation4 + $0x178] sm:$0xff]
    %v2263 = vld [vmem:[#allocation4 + $0x180] sm:$0xff]
    %v2264 = vld [vmem:[#allocation4 + $0x188] sm:$0xff]
    %v2265 = vld [vmem:[#allocation4 + $0x190] sm:$0xff]
    %v2266 = vld [vmem:[#allocation4 + $0x198] sm:$0xff]
    %v2267 = vld [vmem:[#allocation4 + $0x1a0] sm:$0xff]
    %v2268 = vld [vmem:[#allocation4 + $0x1a8] sm:$0xff]
    %v2269 = vld [vmem:[#allocation4 + $0x1b0] sm:$0xff]
    %v2270 = vld [vmem:[#allocation4 + $0x1b8] sm:$0xff]
    %v2271 = vld [vmem:[#allocation4 + $0x1c0] sm:$0xff]
    %v2272 = vld [vmem:[#allocation4 + $0x1c8] sm:$0xff]
    %v2273 = vld [vmem:[#allocation4 + $0x1d0] sm:$0xff]
    %v2274 = vld [vmem:[#allocation4 + $0x1d8] sm:$0xff]
    %v2275 = vld [vmem:[#allocation4 + $0x1e0] sm:$0xff]
    %v2276 = vld [vmem:[#allocation4 + $0x1e8] sm:$0xff]
    %v2277 = vld [vmem:[#allocation4 + $0x1f0] sm:$0xff]
    %v2278 = vld [vmem:[#allocation4 + $0x1f8] sm:$0xff]
    %v2280 = vperm.slane %v2208, 0
    %v2281 = vperm.slane %v2208, 1
    %v2348 = vunpack.c.l.b16 %v2215
    %v2349 = vunpack.c.h.b16 %v2215
    %v2350 = vunpack.c.l.b16 %v2216
    %v2351 = vunpack.c.h.b16 %v2216
    %v2352 = vunpack.c.l.b16 %v2217
    %v2353 = vunpack.c.h.b16 %v2217
    %v2354 = vunpack.c.l.b16 %v2218
    %v2355 = vunpack.c.h.b16 %v2218
    %v2356 = vunpack.c.l.b16 %v2219
    %v2357 = vunpack.c.h.b16 %v2219
    %v2358 = vunpack.c.l.b16 %v2220
    %v2359 = vunpack.c.h.b16 %v2220
    %v2360 = vunpack.c.l.b16 %v2221
    %v2361 = vunpack.c.h.b16 %v2221
    %v2362 = vunpack.c.l.b16 %v2222
    %v2363 = vunpack.c.h.b16 %v2222
    %v2364 = vunpack.c.l.b16 %v2223
    %v2365 = vunpack.c.h.b16 %v2223
    %v2366 = vunpack.c.l.b16 %v2224
    %v2367 = vunpack.c.h.b16 %v2224
    %v2368 = vunpack.c.l.b16 %v2225
    %v2369 = vunpack.c.h.b16 %v2225
    %v2370 = vunpack.c.l.b16 %v2226
    %v2371 = vunpack.c.h.b16 %v2226
    %v2372 = vunpack.c.l.b16 %v2227
    %v2373 = vunpack.c.h.b16 %v2227
    %v2374 = vunpack.c.l.b16 %v2228
    %v2375 = vunpack.c.h.b16 %v2228
    %v2376 = vunpack.c.l.b16 %v2229
    %v2377 = vunpack.c.h.b16 %v2229
    %v2378 = vunpack.c.l.b16 %v2230
    %v2379 = vunpack.c.h.b16 %v2230
    %v2380 = vunpack.c.l.b16 %v2231
    %v2381 = vunpack.c.h.b16 %v2231
    %v2382 = vunpack.c.l.b16 %v2232
    %v2383 = vunpack.c.h.b16 %v2232
    %v2384 = vunpack.c.l.b16 %v2233
    %v2385 = vunpack.c.h.b16 %v2233
    %v2386 = vunpack.c.l.b16 %v2234
    %v2387 = vunpack.c.h.b16 %v2234
    %v2388 = vunpack.c.l.b16 %v2235
    %v2389 = vunpack.c.h.b16 %v2235
    %v2390 = vunpack.c.l.b16 %v2236
    %v2391 = vunpack.c.h.b16 %v2236
    %v2392 = vunpack.c.l.b16 %v2237
    %v2393 = vunpack.c.h.b16 %v2237
    %v2394 = vunpack.c.l.b16 %v2238
    %v2395 = vunpack.c.h.b16 %v2238
    %v2396 = vunpack.c.l.b16 %v2239
    %v2397 = vunpack.c.h.b16 %v2239
    %v2398 = vunpack.c.l.b16 %v2240
    %v2399 = vunpack.c.h.b16 %v2240
    %v2400 = vunpack.c.l.b16 %v2241
    %v2401 = vunpack.c.h.b16 %v2241
    %v2402 = vunpack.c.l.b16 %v2242
    %v2403 = vunpack.c.h.b16 %v2242
    %v2404 = vunpack.c.l.b16 %v2243
    %v2405 = vunpack.c.h.b16 %v2243
    %v2406 = vunpack.c.l.b16 %v2244
    %v2407 = vunpack.c.h.b16 %v2244
    %v2408 = vunpack.c.l.b16 %v2245
    %v2409 = vunpack.c.h.b16 %v2245
    %v2410 = vunpack.c.l.b16 %v2246
    %v2411 = vunpack.c.h.b16 %v2246
    %v2412 = vunpack.c.l.b16 %v2247
    %v2413 = vunpack.c.h.b16 %v2247
    %v2414 = vunpack.c.l.b16 %v2248
    %v2415 = vunpack.c.h.b16 %v2248
    %v2416 = vunpack.c.l.b16 %v2249
    %v2417 = vunpack.c.h.b16 %v2249
    %v2418 = vunpack.c.l.b16 %v2250
    %v2419 = vunpack.c.h.b16 %v2250
    %v2420 = vunpack.c.l.b16 %v2251
    %v2421 = vunpack.c.h.b16 %v2251
    %v2422 = vunpack.c.l.b16 %v2252
    %v2423 = vunpack.c.h.b16 %v2252
    %v2424 = vunpack.c.l.b16 %v2253
    %v2425 = vunpack.c.h.b16 %v2253
    %v2426 = vunpack.c.l.b16 %v2254
    %v2427 = vunpack.c.h.b16 %v2254
    %v2428 = vunpack.c.l.b16 %v2255
    %v2429 = vunpack.c.h.b16 %v2255
    %v2430 = vunpack.c.l.b16 %v2256
    %v2431 = vunpack.c.h.b16 %v2256
    %v2432 = vunpack.c.l.b16 %v2257
    %v2433 = vunpack.c.h.b16 %v2257
    %v2434 = vunpack.c.l.b16 %v2258
    %v2435 = vunpack.c.h.b16 %v2258
    %v2436 = vunpack.c.l.b16 %v2259
    %v2437 = vunpack.c.h.b16 %v2259
    %v2438 = vunpack.c.l.b16 %v2260
    %v2439 = vunpack.c.h.b16 %v2260
    %v2440 = vunpack.c.l.b16 %v2261
    %v2441 = vunpack.c.h.b16 %v2261
    %v2442 = vunpack.c.l.b16 %v2262
    %v2443 = vunpack.c.h.b16 %v2262
    %v2444 = vunpack.c.l.b16 %v2263
    %v2445 = vunpack.c.h.b16 %v2263
    %v2446 = vunpack.c.l.b16 %v2264
    %v2447 = vunpack.c.h.b16 %v2264
    %v2448 = vunpack.c.l.b16 %v2265
    %v2449 = vunpack.c.h.b16 %v2265
    %v2450 = vunpack.c.l.b16 %v2266
    %v2451 = vunpack.c.h.b16 %v2266
    %v2452 = vunpack.c.l.b16 %v2267
    %v2453 = vunpack.c.h.b16 %v2267
    %v2454 = vunpack.c.l.b16 %v2268
    %v2455 = vunpack.c.h.b16 %v2268
    %v2456 = vunpack.c.l.b16 %v2269
    %v2457 = vunpack.c.h.b16 %v2269
    %v2458 = vunpack.c.l.b16 %v2270
    %v2459 = vunpack.c.h.b16 %v2270
    %v2460 = vunpack.c.l.b16 %v2271
    %v2461 = vunpack.c.h.b16 %v2271
    %v2462 = vunpack.c.l.b16 %v2272
    %v2463 = vunpack.c.h.b16 %v2272
    %v2464 = vunpack.c.l.b16 %v2273
    %v2465 = vunpack.c.h.b16 %v2273
    %v2466 = vunpack.c.l.b16 %v2274
    %v2467 = vunpack.c.h.b16 %v2274
    %v2468 = vunpack.c.l.b16 %v2275
    %v2469 = vunpack.c.h.b16 %v2275
    %v2470 = vunpack.c.l.b16 %v2276
    %v2471 = vunpack.c.h.b16 %v2276
    %v2472 = vunpack.c.l.b16 %v2277
    %v2473 = vunpack.c.h.b16 %v2277
    %v2474 = vunpack.c.l.b16 %v2278
    %v2475 = vunpack.c.h.b16 %v2278
    %v2476 = vpack.c.b16 %v2350, %v2348
    %v2477 = vpack.c.b16 %v2351, %v2349
    %v2478 = vpack.c.b16 %v2354, %v2352
    %v2479 = vpack.c.b16 %v2355, %v2353
    %v2480 = vpack.c.b16 %v2358, %v2356
    %v2481 = vpack.c.b16 %v2359, %v2357
    %v2482 = vpack.c.b16 %v2362, %v2360
    %v2483 = vpack.c.b16 %v2363, %v2361
    %v2484 = vpack.c.b16 %v2366, %v2364
    %v2485 = vpack.c.b16 %v2367, %v2365
    %v2486 = vpack.c.b16 %v2370, %v2368
    %v2487 = vpack.c.b16 %v2371, %v2369
    %v2488 = vpack.c.b16 %v2374, %v2372
    %v2489 = vpack.c.b16 %v2375, %v2373
    %v2490 = vpack.c.b16 %v2378, %v2376
    %v2491 = vpack.c.b16 %v2379, %v2377
    %v2492 = vpack.c.b16 %v2382, %v2380
    %v2493 = vpack.c.b16 %v2383, %v2381
    %v2494 = vpack.c.b16 %v2386, %v2384
    %v2495 = vpack.c.b16 %v2387, %v2385
    %v2496 = vpack.c.b16 %v2390, %v2388
    %v2497 = vpack.c.b16 %v2391, %v2389
    %v2498 = vpack.c.b16 %v2394, %v2392
    %v2499 = vpack.c.b16 %v2395, %v2393
    %v2500 = vpack.c.b16 %v2398, %v2396
    %v2501 = vpack.c.b16 %v2399, %v2397
    %v2502 = vpack.c.b16 %v2402, %v2400
    %v2503 = vpack.c.b16 %v2403, %v2401
    %v2504 = vpack.c.b16 %v2406, %v2404
    %v2505 = vpack.c.b16 %v2407, %v2405
    %v2506 = vpack.c.b16 %v2410, %v2408
    %v2507 = vpack.c.b16 %v2411, %v2409
    %v2508 = vpack.c.b16 %v2414, %v2412
    %v2509 = vpack.c.b16 %v2415, %v2413
    %v2510 = vpack.c.b16 %v2418, %v2416
    %v2511 = vpack.c.b16 %v2419, %v2417
    %v2512 = vpack.c.b16 %v2422, %v2420
    %v2513 = vpack.c.b16 %v2423, %v2421
    %v2514 = vpack.c.b16 %v2426, %v2424
    %v2515 = vpack.c.b16 %v2427, %v2425
    %v2516 = vpack.c.b16 %v2430, %v2428
    %v2517 = vpack.c.b16 %v2431, %v2429
    %v2518 = vpack.c.b16 %v2434, %v2432
    %v2519 = vpack.c.b16 %v2435, %v2433
    %v2520 = vpack.c.b16 %v2438, %v2436
    %v2521 = vpack.c.b16 %v2439, %v2437
    %v2522 = vpack.c.b16 %v2442, %v2440
    %v2523 = vpack.c.b16 %v2443, %v2441
    %v2524 = vpack.c.b16 %v2446, %v2444
    %v2525 = vpack.c.b16 %v2447, %v2445
    %v2526 = vpack.c.b16 %v2450, %v2448
    %v2527 = vpack.c.b16 %v2451, %v2449
    %v2528 = vpack.c.b16 %v2454, %v2452
    %v2529 = vpack.c.b16 %v2455, %v2453
    %v2530 = vpack.c.b16 %v2458, %v2456
    %v2531 = vpack.c.b16 %v2459, %v2457
    %v2532 = vpack.c.b16 %v2462, %v2460
    %v2533 = vpack.c.b16 %v2463, %v2461
    %v2534 = vpack.c.b16 %v2466, %v2464
    %v2535 = vpack.c.b16 %v2467, %v2465
    %v2536 = vpack.c.b16 %v2470, %v2468
    %v2537 = vpack.c.b16 %v2471, %v2469
    %v2538 = vpack.c.b16 %v2474, %v2472
    %v2539 = vpack.c.b16 %v2475, %v2473
    %2604 = vmatpush.bf16.msra.mxu0 %v2490
    %2605 = vmatpush.bf16.msra.mxu0 %v2488
    %2606 = vmatpush.bf16.msra.mxu0 %v2486
    %2607 = vmatpush.bf16.msra.mxu0 %v2484
    %2608 = vmatpush.bf16.msra.mxu0 %v2482
    %2609 = vmatpush.bf16.msra.mxu0 %v2480
    %2610 = vmatpush.bf16.msra.mxu0 %v2478
    %2611 = vmatpush.bf16.msra.mxu0 %v2476
    %2612 = vmatmul.bf16.gmra.mxu0 %v2211
    %v2613 = vpop.f32.mrf.mxu0
    %v2614 = vadd.f32 %v2280, %v2613
    %v2615 = vpop.f32.mrf.mxu0
    %2616 = vdwg.mxu0
    %2617 = vmatpush.bf16.msra.mxu0 %v2506
    %2618 = vmatpush.bf16.msra.mxu0 %v2504
    %2619 = vmatpush.bf16.msra.mxu0 %v2502
    %2620 = vmatpush.bf16.msra.mxu0 %v2500
    %2621 = vmatpush.bf16.msra.mxu0 %v2498
    %2622 = vmatpush.bf16.msra.mxu0 %v2496
    %2623 = vmatpush.bf16.msra.mxu0 %v2494
    %2624 = vmatpush.bf16.msra.mxu0 %v2492
    %2625 = vmatmul.bf16.gmra.mxu0 %v2212
    %v2626 = vpop.f32.mrf.mxu0
    %v2627 = vadd.f32 %v2614, %v2626
    %v2628 = vpop.f32.mrf.mxu0
    %2629 = vdwg.mxu0
    %2630 = vmatpush.bf16.msra.mxu0 %v2522
    %2631 = vmatpush.bf16.msra.mxu0 %v2520
    %2632 = vmatpush.bf16.msra.mxu0 %v2518
    %2633 = vmatpush.bf16.msra.mxu0 %v2516
    %2634 = vmatpush.bf16.msra.mxu0 %v2514
    %2635 = vmatpush.bf16.msra.mxu0 %v2512
    %2636 = vmatpush.bf16.msra.mxu0 %v2510
    %2637 = vmatpush.bf16.msra.mxu0 %v2508
    %2638 = vmatmul.bf16.gmra.mxu0 %v2213
    %v2639 = vpop.f32.mrf.mxu0
    %v2640 = vadd.f32 %v2627, %v2639
    %v2641 = vpop.f32.mrf.mxu0
    %2642 = vdwg.mxu0
    %2643 = vmatpush.bf16.msra.mxu0 %v2538
    %2644 = vmatpush.bf16.msra.mxu0 %v2536
    %2645 = vmatpush.bf16.msra.mxu0 %v2534
    %2646 = vmatpush.bf16.msra.mxu0 %v2532
    %2647 = vmatpush.bf16.msra.mxu0 %v2530
    %2648 = vmatpush.bf16.msra.mxu0 %v2528
    %2649 = vmatpush.bf16.msra.mxu0 %v2526
    %2650 = vmatpush.bf16.msra.mxu0 %v2524
    %2651 = vmatmul.bf16.gmra.mxu0 %v2214
    %v2652 = vpop.f32.mrf.mxu0
    %v2653 = vadd.f32 %v2640, %v2652
    %v2654 = vpop.f32.mrf.mxu0
    %2655 = vdwg.mxu0
    %2656 = vmatpush.bf16.msra.mxu0 %v2491
    %2657 = vmatpush.bf16.msra.mxu0 %v2489
    %2658 = vmatpush.bf16.msra.mxu0 %v2487
    %2659 = vmatpush.bf16.msra.mxu0 %v2485
    %2660 = vmatpush.bf16.msra.mxu0 %v2483
    %2661 = vmatpush.bf16.msra.mxu0 %v2481
    %2662 = vmatpush.bf16.msra.mxu0 %v2479
    %2663 = vmatpush.bf16.msra.mxu0 %v2477
    %2664 = vmatmul.bf16.gmra.mxu0 %v2211
    %v2665 = vpop.f32.mrf.mxu0
    %v2666 = vadd.f32 %v2281, %v2665
    %v2667 = vpop.f32.mrf.mxu0
    %2668 = vdwg.mxu0
    %2669 = vmatpush.bf16.msra.mxu0 %v2507
    %2670 = vmatpush.bf16.msra.mxu0 %v2505
    %2671 = vmatpush.bf16.msra.mxu0 %v2503
    %2672 = vmatpush.bf16.msra.mxu0 %v2501
    %2673 = vmatpush.bf16.msra.mxu0 %v2499
    %2674 = vmatpush.bf16.msra.mxu0 %v2497
    %2675 = vmatpush.bf16.msra.mxu0 %v2495
    %2676 = vmatpush.bf16.msra.mxu0 %v2493
    %2677 = vmatmul.bf16.gmra.mxu0 %v2212
    %v2678 = vpop.f32.mrf.mxu0
    %v2679 = vadd.f32 %v2666, %v2678
    %v2680 = vpop.f32.mrf.mxu0
    %2681 = vdwg.mxu0
    %2682 = vmatpush.bf16.msra.mxu0 %v2523
    %2683 = vmatpush.bf16.msra.mxu0 %v2521
    %2684 = vmatpush.bf16.msra.mxu0 %v2519
    %2685 = vmatpush.bf16.msra.mxu0 %v2517
    %2686 = vmatpush.bf16.msra.mxu0 %v2515
    %2687 = vmatpush.bf16.msra.mxu0 %v2513
    %2688 = vmatpush.bf16.msra.mxu0 %v2511
    %2689 = vmatpush.bf16.msra.mxu0 %v2509
    %2690 = vmatmul.bf16.gmra.mxu0 %v2213
    %v2691 = vpop.f32.mrf.mxu0
    %v2692 = vadd.f32 %v2679, %v2691
    %v2693 = vpop.f32.mrf.mxu0
    %2694 = vdwg.mxu0
    %2695 = vmatpush.bf16.msra.mxu0 %v2539
    %2696 = vmatpush.bf16.msra.mxu0 %v2537
    %2697 = vmatpush.bf16.msra.mxu0 %v2535
    %2698 = vmatpush.bf16.msra.mxu0 %v2533
    %2699 = vmatpush.bf16.msra.mxu0 %v2531
    %2700 = vmatpush.bf16.msra.mxu0 %v2529
    %2701 = vmatpush.bf16.msra.mxu0 %v2527
    %2702 = vmatpush.bf16.msra.mxu0 %v2525
    %2703 = vmatmul.bf16.gmra.mxu0 %v2214
    %v2704 = vpop.f32.mrf.mxu0
    %v2705 = vadd.f32 %v2692, %v2704
    %v2706 = vpop.f32.mrf.mxu0
    %2707 = vdwg.mxu0
    %v2708 = vmax.f32 %v2653, 0.0
    %v2709 = vmax.f32 %v2705, 0.0
    %v2710 = vrot.slane %v2708, 4
    %v2711 = vadd.f32 %v2708, %v2710
    %v2712 = vrot.slane %v2711, 2
    %v2713 = vadd.f32 %v2711, %v2712
    %v2714 = vrot.slane %v2713, 1
    %v2715 = vadd.f32 %v2713, %v2714
    %v2716 = vrot.slane %v2709, 4
    %v2717 = vadd.f32 %v2709, %v2716
    %v2718 = vrot.slane %v2717, 2
    %v2719 = vadd.f32 %v2717, %v2718
    %v2720 = vrot.slane %v2719, 1
    %v2721 = vadd.f32 %v2719, %v2720
    %v2722 = vmul.f32 %v2715, %v2085
    %v2723 = vmul.f32 %v2721, %v2085
    %v2724 = vmul.f32 %v2708, %v2708
    %v2725 = vmul.f32 %v2709, %v2709
    %v2726 = vrot.slane %v2724, 4
    %v2727 = vadd.f32 %v2724, %v2726
    %v2728 = vrot.slane %v2727, 2
    %v2729 = vadd.f32 %v2727, %v2728
    %v2730 = vrot.slane %v2729, 1
    %v2731 = vadd.f32 %v2729, %v2730
    %v2732 = vrot.slane %v2725, 4
    %v2733 = vadd.f32 %v2725, %v2732
    %v2734 = vrot.slane %v2733, 2
    %v2735 = vadd.f32 %v2733, %v2734
    %v2736 = vrot.slane %v2735, 1
    %v2737 = vadd.f32 %v2735, %v2736
    %v2738 = vmul.f32 %v2731, %v2085
    %v2739 = vmul.f32 %v2737, %v2085
    %v2740 = vmul.f32 %v2722, %v2722
    %v2741 = vmul.f32 %v2723, %v2723
    %v2742 = vsub.f32 %v2738, %v2740
    %v2743 = vsub.f32 %v2739, %v2741
    %v2744 = vsub.f32 %v2708, %v2722
    %v2745 = vsub.f32 %v2709, %v2723
    %v2746 = vadd.f32 %v2742, 1e-05
    %v2747 = vadd.f32 %v2743, 1e-05
    %v2748 = vrsqrt.pop %v2746
    %v2749 = vmul.f32 %v2748, %v2746
    %v2750 = vmul.f32 %v2749, %v2748
    %v2751 = vmul.f32 0.5, %v2750
    %v2752 = vsub.f32 1.5, %v2751
    %v2753 = vmul.f32 %v2748, %v2752
    %vm2754 = vweird.f32 %v2746
    %vm2755 = vweird.f32 %v2748
    %vm2756 = vmor %vm2754, %vm2755
    %v2757 = vsel %vm2756, %v2748, %v2753
    %v2758 = vrsqrt.pop %v2747
    %v2759 = vmul.f32 %v2758, %v2747
    %v2760 = vmul.f32 %v2759, %v2758
    %v2761 = vmul.f32 0.5, %v2760
    %v2762 = vsub.f32 1.5, %v2761
    %v2763 = vmul.f32 %v2758, %v2762
    %vm2764 = vweird.f32 %v2747
    %vm2765 = vweird.f32 %v2758
    %vm2766 = vmor %vm2764, %vm2765
    %v2767 = vsel %vm2766, %v2758, %v2763
    %v2768 = vmul.f32 %v2744, %v2757
    %v2769 = vmul.f32 %v2745, %v2767
    %v2771 = vperm.slane %v2209, 0
    %v2772 = vperm.slane %v2209, 1
    %v2775 = vmul.f32 %v2768, %v2771
    %v2776 = vmul.f32 %v2769, %v2772
    %v2778 = vperm.slane %v2210, 0
    %v2779 = vperm.slane %v2210, 1
    %v2782 = vadd.f32 %v2775, %v2778
    %v2783 = vadd.f32 %v2776, %v2779
    %v2784 = vld [vmem:[%s5 + $0x12] sm:$0x1]
    %v2785 = vld [vmem:[%s5 + $0x13] sm:$0x1]
    %v2786 = vld [vmem:[%s5 + $0x14] sm:$0x1]
    %v2787 = vpack.c.bf16 %v2782, %v2782
    %v2788 = vpack.c.bf16 %v2783, %v2783
    %v2789 = vld [vmem:[%s3] sm:$0xf]
    %v2790 = vld [vmem:[%s3 + $0x4] sm:$0xf]
    %v2791 = vld [vmem:[%s3 + $0x8] sm:$0xf]
    %v2792 = vld [vmem:[%s3 + $0xc] sm:$0xf]
    %v2793 = vld [vmem:[%s3 + $0x10] sm:$0xf]
    %v2794 = vld [vmem:[%s3 + $0x14] sm:$0xf]
    %v2795 = vld [vmem:[%s3 + $0x18] sm:$0xf]
    %v2796 = vld [vmem:[%s3 + $0x1c] sm:$0xf]
    %v2797 = vld [vmem:[%s3 + $0x20] sm:$0xf]
    %v2798 = vld [vmem:[%s3 + $0x24] sm:$0xf]
    %v2799 = vld [vmem:[%s3 + $0x28] sm:$0xf]
    %v2800 = vld [vmem:[%s3 + $0x2c] sm:$0xf]
    %v2801 = vld [vmem:[%s3 + $0x30] sm:$0xf]
    %v2802 = vld [vmem:[%s3 + $0x34] sm:$0xf]
    %v2803 = vld [vmem:[%s3 + $0x38] sm:$0xf]
    %v2804 = vld [vmem:[%s3 + $0x3c] sm:$0xf]
    %v2805 = vld [vmem:[%s3 + $0x40] sm:$0xf]
    %v2806 = vld [vmem:[%s3 + $0x44] sm:$0xf]
    %v2807 = vld [vmem:[%s3 + $0x48] sm:$0xf]
    %v2808 = vld [vmem:[%s3 + $0x4c] sm:$0xf]
    %v2809 = vld [vmem:[%s3 + $0x50] sm:$0xf]
    %v2810 = vld [vmem:[%s3 + $0x54] sm:$0xf]
    %v2811 = vld [vmem:[%s3 + $0x58] sm:$0xf]
    %v2812 = vld [vmem:[%s3 + $0x5c] sm:$0xf]
    %v2813 = vld [vmem:[%s3 + $0x60] sm:$0xf]
    %v2814 = vld [vmem:[%s3 + $0x64] sm:$0xf]
    %v2815 = vld [vmem:[%s3 + $0x68] sm:$0xf]
    %v2816 = vld [vmem:[%s3 + $0x6c] sm:$0xf]
    %v2817 = vld [vmem:[%s3 + $0x70] sm:$0xf]
    %v2818 = vld [vmem:[%s3 + $0x74] sm:$0xf]
    %v2819 = vld [vmem:[%s3 + $0x78] sm:$0xf]
    %v2820 = vld [vmem:[%s3 + $0x7c] sm:$0xf]
    %v2822 = vperm.slane %v2784, 0
    %v2856 = vunpack.c.l.b16 %v2789
    %v2857 = vunpack.c.l.b16 %v2790
    %v2858 = vunpack.c.l.b16 %v2791
    %v2859 = vunpack.c.l.b16 %v2792
    %v2860 = vunpack.c.l.b16 %v2793
    %v2861 = vunpack.c.l.b16 %v2794
    %v2862 = vunpack.c.l.b16 %v2795
    %v2863 = vunpack.c.l.b16 %v2796
    %v2864 = vunpack.c.l.b16 %v2797
    %v2865 = vunpack.c.l.b16 %v2798
    %v2866 = vunpack.c.l.b16 %v2799
    %v2867 = vunpack.c.l.b16 %v2800
    %v2868 = vunpack.c.l.b16 %v2801
    %v2869 = vunpack.c.l.b16 %v2802
    %v2870 = vunpack.c.l.b16 %v2803
    %v2871 = vunpack.c.l.b16 %v2804
    %v2872 = vunpack.c.l.b16 %v2805
    %v2873 = vunpack.c.l.b16 %v2806
    %v2874 = vunpack.c.l.b16 %v2807
    %v2875 = vunpack.c.l.b16 %v2808
    %v2876 = vunpack.c.l.b16 %v2809
    %v2877 = vunpack.c.l.b16 %v2810
    %v2878 = vunpack.c.l.b16 %v2811
    %v2879 = vunpack.c.l.b16 %v2812
    %v2880 = vunpack.c.l.b16 %v2813
    %v2881 = vunpack.c.l.b16 %v2814
    %v2882 = vunpack.c.l.b16 %v2815
    %v2883 = vunpack.c.l.b16 %v2816
    %v2884 = vunpack.c.l.b16 %v2817
    %v2885 = vunpack.c.l.b16 %v2818
    %v2886 = vunpack.c.l.b16 %v2819
    %v2887 = vunpack.c.l.b16 %v2820
    %v2888 = vpack.c.b16 %v2857, %v2856
    %v2889 = vpack.c.b16 %v2859, %v2858
    %v2890 = vpack.c.b16 %v2861, %v2860
    %v2891 = vpack.c.b16 %v2863, %v2862
    %v2892 = vpack.c.b16 %v2865, %v2864
    %v2893 = vpack.c.b16 %v2867, %v2866
    %v2894 = vpack.c.b16 %v2869, %v2868
    %v2895 = vpack.c.b16 %v2871, %v2870
    %v2896 = vpack.c.b16 %v2873, %v2872
    %v2897 = vpack.c.b16 %v2875, %v2874
    %v2898 = vpack.c.b16 %v2877, %v2876
    %v2899 = vpack.c.b16 %v2879, %v2878
    %v2900 = vpack.c.b16 %v2881, %v2880
    %v2901 = vpack.c.b16 %v2883, %v2882
    %v2902 = vpack.c.b16 %v2885, %v2884
    %v2903 = vpack.c.b16 %v2887, %v2886
    %2920 = vmatpush.bf16.msra.mxu0 %v2895
    %2921 = vmatpush.bf16.msra.mxu0 %v2894
    %2922 = vmatpush.bf16.msra.mxu0 %v2893
    %2923 = vmatpush.bf16.msra.mxu0 %v2892
    %2924 = vmatpush.bf16.msra.mxu0 %v2891
    %2925 = vmatpush.bf16.msra.mxu0 %v2890
    %2926 = vmatpush.bf16.msra.mxu0 %v2889
    %2927 = vmatpush.bf16.msra.mxu0 %v2888
    %2928 = vmatmul.bf16.gmra.mxu0 %v2787
    %v2929 = vpop.f32.mrf.mxu0
    %v2930 = vadd.f32 %v2822, %v2929
    %v2931 = vpop.f32.mrf.mxu0
    %2932 = vdwg.mxu0
    %2933 = vmatpush.bf16.msra.mxu0 %v2903
    %2934 = vmatpush.bf16.msra.mxu0 %v2902
    %2935 = vmatpush.bf16.msra.mxu0 %v2901
    %2936 = vmatpush.bf16.msra.mxu0 %v2900
    %2937 = vmatpush.bf16.msra.mxu0 %v2899
    %2938 = vmatpush.bf16.msra.mxu0 %v2898
    %2939 = vmatpush.bf16.msra.mxu0 %v2897
    %2940 = vmatpush.bf16.msra.mxu0 %v2896
    %2941 = vmatmul.bf16.gmra.mxu0 %v2788
    %v2942 = vpop.f32.mrf.mxu0
    %v2943 = vadd.f32 %v2930, %v2942
    %v2944 = vpop.f32.mrf.mxu0
    %2945 = vdwg.mxu0
    %v2946 = vmax.f32 %v2943, 0.0
    %v2947 = vrot.slane %v2946, 4
    %v2948 = vadd.f32 %v2946, %v2947
    %v2949 = vrot.slane %v2948, 2
    %v2950 = vadd.f32 %v2948, %v2949
    %v2951 = vrot.slane %v2950, 1
    %v2952 = vadd.f32 %v2950, %v2951
    %v2953 = vmul.f32 %v2952, %v2085
    %v2954 = vmul.f32 %v2946, %v2946
    %v2955 = vrot.slane %v2954, 4
    %v2956 = vadd.f32 %v2954, %v2955
    %v2957 = vrot.slane %v2956, 2
    %v2958 = vadd.f32 %v2956, %v2957
    %v2959 = vrot.slane %v2958, 1
    %v2960 = vadd.f32 %v2958, %v2959
    %v2961 = vmul.f32 %v2960, %v2085
    %v2962 = vmul.f32 %v2953, %v2953
    %v2963 = vsub.f32 %v2961, %v2962
    %v2964 = vsub.f32 %v2946, %v2953
    %v2965 = vadd.f32 %v2963, 1e-05
    %v2966 = vrsqrt.pop %v2965
    %v2967 = vmul.f32 %v2966, %v2965
    %v2968 = vmul.f32 %v2967, %v2966
    %v2969 = vmul.f32 0.5, %v2968
    %v2970 = vsub.f32 1.5, %v2969
    %v2971 = vmul.f32 %v2966, %v2970
    %vm2972 = vweird.f32 %v2965
    %vm2973 = vweird.f32 %v2966
    %vm2974 = vmor %vm2972, %vm2973
    %v2975 = vsel %vm2974, %v2966, %v2971
    %v2976 = vmul.f32 %v2964, %v2975
    %v2978 = vperm.slane %v2785, 0
    %v2980 = vmul.f32 %v2976, %v2978
    %v2982 = vperm.slane %v2786, 0
    %v2984 = vadd.f32 %v2980, %v2982
    %v2985 = vld [vmem:[%s5 + $0x15] sm:$0x1]
    %v2986 = vld [vmem:[%s5 + $0x16] sm:$0x1]
    %v2987 = vld [vmem:[%s5 + $0x17] sm:$0x1]
    %v2988 = vpack.c.bf16 %v2984, %v2984
    %v2989 = vld [vmem:[%s4] sm:$0xf]
    %v2990 = vld [vmem:[%s4 + $0x4] sm:$0xf]
    %v2991 = vld [vmem:[%s4 + $0x8] sm:$0xf]
    %v2992 = vld [vmem:[%s4 + $0xc] sm:$0xf]
    %v2993 = vld [vmem:[%s4 + $0x10] sm:$0xf]
    %v2994 = vld [vmem:[%s4 + $0x14] sm:$0xf]
    %v2995 = vld [vmem:[%s4 + $0x18] sm:$0xf]
    %v2996 = vld [vmem:[%s4 + $0x1c] sm:$0xf]
    %v2997 = vld [vmem:[%s4 + $0x20] sm:$0xf]
    %v2998 = vld [vmem:[%s4 + $0x24] sm:$0xf]
    %v2999 = vld [vmem:[%s4 + $0x28] sm:$0xf]
    %v3000 = vld [vmem:[%s4 + $0x2c] sm:$0xf]
    %v3001 = vld [vmem:[%s4 + $0x30] sm:$0xf]
    %v3002 = vld [vmem:[%s4 + $0x34] sm:$0xf]
    %v3003 = vld [vmem:[%s4 + $0x38] sm:$0xf]
    %v3004 = vld [vmem:[%s4 + $0x3c] sm:$0xf]
    %v3006 = vperm.slane %v2985, 0
    %v3024 = vunpack.c.l.b16 %v2989
    %v3025 = vunpack.c.l.b16 %v2990
    %v3026 = vunpack.c.l.b16 %v2991
    %v3027 = vunpack.c.l.b16 %v2992
    %v3028 = vunpack.c.l.b16 %v2993
    %v3029 = vunpack.c.l.b16 %v2994
    %v3030 = vunpack.c.l.b16 %v2995
    %v3031 = vunpack.c.l.b16 %v2996
    %v3032 = vunpack.c.l.b16 %v2997
    %v3033 = vunpack.c.l.b16 %v2998
    %v3034 = vunpack.c.l.b16 %v2999
    %v3035 = vunpack.c.l.b16 %v3000
    %v3036 = vunpack.c.l.b16 %v3001
    %v3037 = vunpack.c.l.b16 %v3002
    %v3038 = vunpack.c.l.b16 %v3003
    %v3039 = vunpack.c.l.b16 %v3004
    %v3040 = vpack.c.b16 %v3025, %v3024
    %v3041 = vpack.c.b16 %v3027, %v3026
    %v3042 = vpack.c.b16 %v3029, %v3028
    %v3043 = vpack.c.b16 %v3031, %v3030
    %v3044 = vpack.c.b16 %v3033, %v3032
    %v3045 = vpack.c.b16 %v3035, %v3034
    %v3046 = vpack.c.b16 %v3037, %v3036
    %v3047 = vpack.c.b16 %v3039, %v3038
    %3056 = vmatpush.bf16.msra.mxu0 %v3047
    %3057 = vmatpush.bf16.msra.mxu0 %v3046
    %3058 = vmatpush.bf16.msra.mxu0 %v3045
    %3059 = vmatpush.bf16.msra.mxu0 %v3044
    %3060 = vmatpush.bf16.msra.mxu0 %v3043
    %3061 = vmatpush.bf16.msra.mxu0 %v3042
    %3062 = vmatpush.bf16.msra.mxu0 %v3041
    %3063 = vmatpush.bf16.msra.mxu0 %v3040
    %3064 = vmatmul.bf16.gmra.mxu0 %v2988
    %v3065 = vpop.f32.mrf.mxu0
    %v3066 = vadd.f32 %v3006, %v3065
    %v3067 = vpop.f32.mrf.mxu0
    %3068 = vdwg.mxu0
    %v3069 = vmax.f32 %v3066, 0.0
    %vm3070 = vcmask 523264
    %v3071 = vsel %vm3070, %v3069, 0.0
    %v3072 = vrot.slane %v3071, 4
    %v3073 = vadd.f32 %v3071, %v3072
    %v3074 = vrot.slane %v3073, 2
    %v3075 = vadd.f32 %v3073, %v3074
    %v3076 = vrot.slane %v3075, 1
    %v3077 = vadd.f32 %v3075, %v3076
    %v3078 = vmul.f32 %v3077, %v2085
    %v3079 = vmul.f32 %v3069, %v3069
    %v3080 = vsel %vm3070, %v3079, 0.0
    %v3081 = vrot.slane %v3080, 4
    %v3082 = vadd.f32 %v3080, %v3081
    %v3083 = vrot.slane %v3082, 2
    %v3084 = vadd.f32 %v3082, %v3083
    %v3085 = vrot.slane %v3084, 1
    %v3086 = vadd.f32 %v3084, %v3085
    %v3087 = vmul.f32 %v3086, %v2085
    %v3088 = vmul.f32 %v3078, %v3078
    %v3089 = vsub.f32 %v3087, %v3088
    %v3090 = vsub.f32 %v3069, %v3078
    %v3091 = vadd.f32 %v3089, 1e-05
    %v3092 = vrsqrt.pop %v3091
    %v3093 = vmul.f32 %v3092, %v3091
    %v3094 = vmul.f32 %v3093, %v3092
    %v3095 = vmul.f32 0.5, %v3094
    %v3096 = vsub.f32 1.5, %v3095
    %v3097 = vmul.f32 %v3092, %v3096
    %vm3098 = vweird.f32 %v3091
    %vm3099 = vweird.f32 %v3092
    %vm3100 = vmor %vm3098, %vm3099
    %v3101 = vsel %vm3100, %v3092, %v3097
    %v3102 = vmul.f32 %v3090, %v3101
    %v3104 = vperm.slane %v2986, 0
    %v3106 = vmul.f32 %v3102, %v3104
    %v3108 = vperm.slane %v2987, 0
    %v3110 = vadd.f32 %v3106, %v3108
    %v3111 = vld [vmem:[%s5 + $0x19] sm:$0x1]
    %v3113 = vperm.slane %v3111, 0
    %v3115 = vmul.f32 %v3110, %v3113
    %v3116 = vsel %vm3070, %v3115, 0.0
    %3117 = vadd.xlane.f32.xlu0 %v3116
    %v3118 = vpop.xlane.xlu0 %3117
    %v3119 = vld [vmem:[%s5 + $0x18] sm:$0x1]
    %v3121 = vperm.slane %v3119, 0
    %v3123 = vadd.f32 %v3118, %v3121
    %v3124 = vxor.u32 %v3123, 2147483648
    %v3125 = vmul.f32 %v3124, 1.442695
    %v3126 = vpow.pop %v3125
    %v3127 = vadd.f32 %v3126, 1.0
    %v3128 = vrcp.pop %v3127
    %v3129 = vmul.f32 %v3127, %v3128
    %v3130 = vsub.f32 1.0, %v3129
    %v3131 = vmul.f32 %v3128, %v3130
    %v3132 = vadd.f32 %v3128, %v3131
    %vm3133 = vweird.f32 %v3127
    %vm3134 = vweird.f32 %v3128
    %vm3135 = vmor %vm3133, %vm3134
    %v3136 = vsel %vm3135, %v3128, %v3132
    %v3137 = vand.u32 2147483647, %v3127
    %vm3138 = vcmp.eq.f32.partialorder %v3137, 8.507059e+37
    %v3139 = vand.u32 %v3127, 2147483648
    %v3140 = vor.u32 1.1754944e-38, %v3139
    %v3141 = vsel %vm3138, %v3140, %v3136
    %v3142 = vmul.f32 1.0, %v3141
    %vm3143 = vcmask 7168
    %3144 = vst.msk [vmem:[%s6] sm:$0xff] %vm3143, %v3142
    // Predicated region
    $region34: #{sentiment_classifier.1} parent=1 // pred_check
      _
    $region35: #{sentiment_classifier.1} parent=1 // pred_check_branch
      %3146 = sbr.rel (0) target = $region37
    $region36: #{sentiment_classifier.1} parent=1 // pred_region
      _
    $region37: #{sentiment_classifier.1} parent=1 // pred_fallthru
      _
    // Predicated region
    $region38: #{sentiment_classifier.1} parent=1 // pred_check
      _
    $region39: #{sentiment_classifier.1} parent=1 // pred_check_branch
      %3148 = sbr.rel (0) target = $region41
    $region40: #{sentiment_classifier.1} parent=1 // pred_region
      _
    $region41: #{sentiment_classifier.1} parent=1 // pred_fallthru
      _
    %3149 = vsyncpa [#allocation3], 1
    %3150 = vsyncpa [#allocation5], 1

</llo_original>
